<compile_context>
chip_gen: v7x
topology: tpu7x:2x2x1
jax: 0.10.0
libtpu: 0.0.40
codegen_flags: <defaults>
</compile_context>

<pallas_src>
from functools import partial

import jax
import jax.numpy as jnp
from jax.experimental import pallas as pl
from jax.experimental.pallas import tpu as pltpu


# ----------------------------- Pallas kernel ------------------------------- #

def igmc_kernel(uidx_ref, midx_ref, x_ref, adj_ref, *refs,
                num_relations, num_layers, latent_dim):
    """One enclosing subgraph per grid step; all intermediates stay VMEM/vreg."""
    n_conv = 3 * num_layers
    conv_refs = refs[:n_conv]
    w1u_refs = refs[n_conv:n_conv + num_layers]
    w1m_refs = refs[n_conv + num_layers:n_conv + 2 * num_layers]
    lin1_b_ref = refs[n_conv + 2 * num_layers + 0]
    lin2_w_ref = refs[n_conv + 2 * num_layers + 1]
    lin2_b_ref = refs[n_conv + 2 * num_layers + 2]
    out_ref = refs[n_conv + 2 * num_layers + 3]
    h_scr = refs[n_conv + 2 * num_layers + 4]

    g = pl.program_id(0)
    uidx = uidx_ref[g]            # local row of the target user  (x[:,0]==1)
    midx = midx_ref[g]            # local row of the target movie (x[:,1]==1)

    h = x_ref[...]                # [npg, Fin]  f32 activations
    adj = adj_ref[...]            # [npg,npg] (R==1) or [R,npg,npg]  bf16, row-normalized
    h1 = lin1_b_ref[...]          # [1, 128]   f32 head accumulator (starts at lin1 bias)

    for l in range(num_layers):                        # static unroll
        wroot_ref, wrel_ref, b_ref = conv_refs[3 * l: 3 * l + 3]
        fout = latent_dim[l]
        h_b = h.astype(jnp.bfloat16)                   # bf16 only into the MXU
        # Accumulated dots (no lane-axis concat of [h | msg_0 | ...]):
        acc = jnp.dot(h_b, wroot_ref[...], preferred_element_type=jnp.float32)
        for r in range(num_relations):
            adj_r = adj if num_relations == 1 else adj[r]
            msg = jnp.dot(adj_r, h_b, preferred_element_type=jnp.float32)
            acc = acc + jnp.dot(msg.astype(jnp.bfloat16), wrel_ref[r],
                                preferred_element_type=jnp.float32)
        h = jnp.tanh(acc + b_ref[...])                 # [npg, Fout] f32

        # Target-row gather (scalar-prefetch indices) folded into the head:
        # lin1 applied per layer chunk (distributivity) => no concat_states tensor.
        h_scr[:, :fout] = h
        u = h_scr[pl.ds(uidx, 1), :][:, :fout].astype(jnp.bfloat16)   # [1, Fout]
        m = h_scr[pl.ds(midx, 1), :][:, :fout].astype(jnp.bfloat16)   # [1, Fout]
        h1 = h1 + jnp.dot(u, w1u_refs[l][...], preferred_element_type=jnp.float32)
        h1 = h1 + jnp.dot(m, w1m_refs[l][...], preferred_element_type=jnp.float32)

    h1 = jnp.maximum(h1, 0.0)                          # relu(lin1); dropout = identity (eval)
    out = (jnp.dot(h1.astype(jnp.bfloat16), lin2_w_ref[...],
                   preferred_element_type=jnp.float32) + lin2_b_ref[...])   # [1, 128]
    out_ref[...] = jnp.broadcast_to(out, out_ref.shape)   # lane-dense unmasked store


# ------------------------------ pallas_call --------------------------------- #

def igmc_pallas_call(prep, x, adj, uidx, midx, *,
                     num_relations, num_layers, latent_dim):
    num_graphs, npg, fin = x.shape

    operands = [x, adj]
    for l in range(num_layers):
        operands += [prep["wroot"][l], prep["wrel"][l], prep["bconv"][l]]
    operands += list(prep["w1u"]) + list(prep["w1m"])
    operands += [prep["lin1_b"], prep["lin2_w"], prep["lin2_b"]]

    def resident(a):              # whole-array VMEM-resident weight (constant block)
        nd = a.ndim
        return pl.BlockSpec(a.shape, lambda g, u, m, _nd=nd: (0,) * _nd)

    in_specs = (
        [pl.BlockSpec((None, npg, fin), lambda g, u, m: (g, 0, 0)),
         pl.BlockSpec((None,) + adj.shape[1:],
                      lambda g, u, m, _nd=adj.ndim: (g,) + (0,) * (_nd - 1))]
        + [resident(a) for a in operands[2:]]
    )
    out_specs = pl.BlockSpec((None, 8, 128), lambda g, u, m: (g, 0, 0))

    # Advisory cost estimate for XLA's scheduler.
    flops, transc = 0, 0
    f_in = fin
    for f_out in latent_dim:
        flops += num_graphs * (2 * num_relations * npg * npg * f_in       # adj_r @ h
                               + 2 * npg * f_in * f_out                   # h @ W_root
                               + 2 * num_relations * npg * f_in * f_out   # msg @ W_r
                               + 2 * 2 * f_out * 128)                     # head chunks
        transc += num_graphs * npg * f_out                                # tanh
        f_in = f_out
    flops += num_graphs * 2 * 128 * 128                                   # lin2 (padded)
    bytes_accessed = (sum(int(a.size) * a.dtype.itemsize for a in operands)
                      + int(uidx.size) * 4 + int(midx.size) * 4
                      + num_graphs * 8 * 128 * 4)

    grid_spec = pltpu.PrefetchScalarGridSpec(
        num_scalar_prefetch=2,
        grid=(num_graphs,),
        in_specs=in_specs,
        out_specs=out_specs,
        scratch_shapes=[pltpu.VMEM((npg, max(latent_dim)), jnp.float32)],
    )

    out = pl.pallas_call(
        partial(igmc_kernel, num_relations=num_relations,
                num_layers=num_layers, latent_dim=tuple(latent_dim)),
        out_shape=jax.ShapeDtypeStruct((num_graphs, 8, 128), jnp.float32),
        grid_spec=grid_spec,
        compiler_params=pltpu.CompilerParams(
            dimension_semantics=("parallel",),            # both TCs on v7x
            vmem_limit_bytes=32 * 1024 * 1024),           # safe on v5e/v6e/v7x
        cost_estimate=pl.CostEstimate(flops=int(flops),
                                      transcendentals=int(transc),
                                      bytes_accessed=int(bytes_accessed)),
    )(uidx, midx, *operands)
    return out[:, 0, 0]                                   # [num_graphs]


# ------------------------------ glue / params ------------------------------ #

def init_params(key, num_features, latent_dim, num_relations, num_bases):
    params = {"convs": []}
    in_dim = num_features
    for out_dim in latent_dim:
        key, k1, k2, k3, k4 = jax.random.split(key, 5)
        params["convs"].append(dict(
            basis=0.1 * jax.random.normal(k1, (num_bases, in_dim, out_dim), jnp.float32),
            att=0.1 * jax.random.normal(k2, (num_relations, num_bases), jnp.float32),
            root=0.1 * jax.random.normal(k3, (in_dim, out_dim), jnp.float32),
            bias=0.1 * jax.random.normal(k4, (out_dim,), jnp.float32),
        ))
        in_dim = out_dim
    key, k1, k2, k3, k4 = jax.random.split(key, 5)
    d_cat = 2 * sum(latent_dim)
    params["lin1_w"] = 0.05 * jax.random.normal(k1, (d_cat, 128), jnp.float32)
    params["lin1_b"] = 0.05 * jax.random.normal(k2, (128,), jnp.float32)
    params["lin2_w"] = 0.05 * jax.random.normal(k3, (128, 1), jnp.float32)
    params["lin2_b"] = 0.05 * jax.random.normal(k4, (1,), jnp.float32)
    return params


def prepare_params(params, latent_dim):
    """One-time parameter prep (NOT per forward):
       - fold basis decomposition: W_r = sum_b att[r,b] * basis[b]
       - keep W_root / W_r / bias per layer (heterogeneous latent_dim OK)
       - split lin1 weight into per-layer user/movie row chunks (distributivity)
       - zero-pad lin2 to 128 lanes; cast MXU operands to bf16."""
    wroot, wrel, bconv = [], [], []
    for c in params["convs"]:
        w_r = jnp.einsum("rb,bio->rio", c["att"], c["basis"])    # [R, Fin, Fout]
        wroot.append(c["root"].astype(jnp.bfloat16))
        wrel.append(w_r.astype(jnp.bfloat16))
        bconv.append(c["bias"].reshape(1, -1))                   # f32
    d = sum(latent_dim)
    w1u, w1m, off = [], [], 0
    for dim in latent_dim:
        w1u.append(params["lin1_w"][off:off + dim].astype(jnp.bfloat16))
        w1m.append(params["lin1_w"][d + off:d + off + dim].astype(jnp.bfloat16))
        off += dim
    lin2_w = jnp.zeros((128, 128), jnp.float32).at[:, 0].set(params["lin2_w"][:, 0])
    lin2_b = jnp.zeros((1, 128), jnp.float32).at[0, 0].set(params["lin2_b"][0])
    return dict(wroot=wroot, wrel=wrel, bconv=bconv, w1u=w1u, w1m=w1m,
                lin1_b=params["lin1_b"].reshape(1, -1),
                lin2_w=lin2_w.astype(jnp.bfloat16), lin2_b=lin2_b)


def build_dense_adj(edge_index, edge_type, num_graphs, nodes_per_graph, num_relations):
    """A[g, r, i, j] = 1/|N_r(i)| if edge j->i of relation r exists within
       subgraph g (mean aggregation). Relation axis squeezed when R == 1."""
    src, dst = edge_index[0], edge_index[1]
    g = dst // nodes_per_graph
    adj = jnp.zeros((num_graphs, num_relations, nodes_per_graph, nodes_per_graph),
                    jnp.float32)
    adj = adj.at[g, edge_type, dst % nodes_per_graph, src % nodes_per_graph].add(1.0)
    deg = jnp.sum(adj, axis=3, keepdims=True)
    adj = adj / jnp.maximum(deg, 1.0)
    if num_relations == 1:
        adj = adj[:, 0]
    return adj.astype(jnp.bfloat16)


def target_indices(x):
    """Local node index of the target user (x[:,0]==1) and movie (x[:,1]==1)
       per subgraph. Assumes exactly one of each per subgraph (IGMC invariant)."""
    uidx = jnp.argmax(x[:, :, 0], axis=1).astype(jnp.int32)
    midx = jnp.argmax(x[:, :, 1], axis=1).astype(jnp.int32)
    return uidx, midx


# ----------------------------------- main ----------------------------------- #

if __name__ == "__main__":
    key = jax.random.PRNGKey(0)

    num_features = 4
    latent_dim = [32, 32, 32, 32]
    num_layers = 4
    num_relations = 1
    num_bases = 2
    num_graphs = 2
    nodes_per_graph = 16
    num_nodes = num_graphs * nodes_per_graph        # 32
    num_edges = 80

    # Node features: one-hot over 4 classes. Node 0 of each subgraph is the target
    # user (class 0), node 1 is the target movie (class 1), rest are classes 2/3.
    key, k_lab = jax.random.split(key)
    labels = 2 + jax.random.randint(k_lab, (num_nodes,), 0, 2)
    for g in range(num_graphs):
        labels = labels.at[g * nodes_per_graph + 0].set(0)
        labels = labels.at[g * nodes_per_graph + 1].set(1)
    x_flat = jax.nn.one_hot(labels, num_features, dtype=jnp.float32)      # [32, 4]

    # Random edges, each contained within one enclosing subgraph, single relation.
    key, k_g, k_src, k_dst = jax.random.split(key, 4)
    e_graph = jax.random.randint(k_g, (num_edges,), 0, num_graphs)
    src = e_graph * nodes_per_graph + jax.random.randint(k_src, (num_edges,), 0, nodes_per_graph)
    dst = e_graph * nodes_per_graph + jax.random.randint(k_dst, (num_edges,), 0, nodes_per_graph)
    edge_index = jnp.stack([src, dst], axis=0)                            # [2, E]
    edge_type = jnp.zeros((num_edges,), jnp.int32)

    adj = build_dense_adj(edge_index, edge_type, num_graphs, nodes_per_graph,
                          num_relations)                                  # [2, 16, 16] bf16
    x = x_flat.reshape(num_graphs, nodes_per_graph, num_features)         # [2, 16, 4]
    uidx, midx = target_indices(x)                                        # [2], [2] int32

    key, k_params = jax.random.split(key)
    params = init_params(k_params, num_features, latent_dim, num_relations, num_bases)
    prep = prepare_params(params, latent_dim)                             # one-time prep

    out = igmc_pallas_call(prep, x, adj, uidx, midx,
                           num_relations=num_relations, num_layers=num_layers,
                           latent_dim=latent_dim)
    out = jax.block_until_ready(out)
    assert out.shape == (num_graphs,) and out.dtype == jnp.float32
    print("KERNEL_OK")
</pallas_src>

<mosaic_0001>
module attributes {stable_mosaic.version = 11 : i64} {
  func.func @igmc_kernel(%arg0: i32, %arg1: memref<2xi32, #tpu.memory_space<smem>>, %arg2: memref<2xi32, #tpu.memory_space<smem>>, %arg3: memref<1x16x4xf32, #tpu.memory_space<vmem>>, %arg4: memref<1x16x16xbf16, #tpu.memory_space<vmem>>, %arg5: memref<4x32xbf16, #tpu.memory_space<vmem>>, %arg6: memref<1x4x32xbf16, #tpu.memory_space<vmem>>, %arg7: memref<1x32xf32, #tpu.memory_space<vmem>>, %arg8: memref<32x32xbf16, #tpu.memory_space<vmem>>, %arg9: memref<1x32x32xbf16, #tpu.memory_space<vmem>>, %arg10: memref<1x32xf32, #tpu.memory_space<vmem>>, %arg11: memref<32x32xbf16, #tpu.memory_space<vmem>>, %arg12: memref<1x32x32xbf16, #tpu.memory_space<vmem>>, %arg13: memref<1x32xf32, #tpu.memory_space<vmem>>, %arg14: memref<32x32xbf16, #tpu.memory_space<vmem>>, %arg15: memref<1x32x32xbf16, #tpu.memory_space<vmem>>, %arg16: memref<1x32xf32, #tpu.memory_space<vmem>>, %arg17: memref<32x128xbf16, #tpu.memory_space<vmem>>, %arg18: memref<32x128xbf16, #tpu.memory_space<vmem>>, %arg19: memref<32x128xbf16, #tpu.memory_space<vmem>>, %arg20: memref<32x128xbf16, #tpu.memory_space<vmem>>, %arg21: memref<32x128xbf16, #tpu.memory_space<vmem>>, %arg22: memref<32x128xbf16, #tpu.memory_space<vmem>>, %arg23: memref<32x128xbf16, #tpu.memory_space<vmem>>, %arg24: memref<32x128xbf16, #tpu.memory_space<vmem>>, %arg25: memref<1x128xf32, #tpu.memory_space<vmem>>, %arg26: memref<128x128xbf16, #tpu.memory_space<vmem>>, %arg27: memref<1x128xf32, #tpu.memory_space<vmem>>, %arg28: memref<1x8x128xf32, #tpu.memory_space<vmem>>, %arg29: memref<16x32xf32, #tpu.memory_space<vmem>>) attributes {dimension_semantics = [#tpu.dimension_semantics<parallel>], iteration_bounds = array<i64: 2>, scalar_prefetch = 2 : i64, scratch_operands = 1 : i64, tpu.core_type = #tpu.core_type<tc>, window_params = [{transform_indices = @transform_0, window_bounds = array<i64: 1, 16, 4>}, {transform_indices = @transform_1, window_bounds = array<i64: 1, 16, 16>}, {pipeline_mode = #tpu.pipeline_mode<synchronous>, transform_indices = @transform_2, window_bounds = array<i64: 4, 32>}, {pipeline_mode = #tpu.pipeline_mode<synchronous>, transform_indices = @transform_3, window_bounds = array<i64: 1, 4, 32>}, {pipeline_mode = #tpu.pipeline_mode<synchronous>, transform_indices = @transform_4, window_bounds = array<i64: 1, 32>}, {pipeline_mode = #tpu.pipeline_mode<synchronous>, transform_indices = @transform_5, window_bounds = array<i64: 32, 32>}, {pipeline_mode = #tpu.pipeline_mode<synchronous>, transform_indices = @transform_6, window_bounds = array<i64: 1, 32, 32>}, {pipeline_mode = #tpu.pipeline_mode<synchronous>, transform_indices = @transform_7, window_bounds = array<i64: 1, 32>}, {pipeline_mode = #tpu.pipeline_mode<synchronous>, transform_indices = @transform_8, window_bounds = array<i64: 32, 32>}, {pipeline_mode = #tpu.pipeline_mode<synchronous>, transform_indices = @transform_9, window_bounds = array<i64: 1, 32, 32>}, {pipeline_mode = #tpu.pipeline_mode<synchronous>, transform_indices = @transform_10, window_bounds = array<i64: 1, 32>}, {pipeline_mode = #tpu.pipeline_mode<synchronous>, transform_indices = @transform_11, window_bounds = array<i64: 32, 32>}, {pipeline_mode = #tpu.pipeline_mode<synchronous>, transform_indices = @transform_12, window_bounds = array<i64: 1, 32, 32>}, {pipeline_mode = #tpu.pipeline_mode<synchronous>, transform_indices = @transform_13, window_bounds = array<i64: 1, 32>}, {pipeline_mode = #tpu.pipeline_mode<synchronous>, transform_indices = @transform_14, window_bounds = array<i64: 32, 128>}, {pipeline_mode = #tpu.pipeline_mode<synchronous>, transform_indices = @transform_15, window_bounds = array<i64: 32, 128>}, {pipeline_mode = #tpu.pipeline_mode<synchronous>, transform_indices = @transform_16, window_bounds = array<i64: 32, 128>}, {pipeline_mode = #tpu.pipeline_mode<synchronous>, transform_indices = @transform_17, window_bounds = array<i64: 32, 128>}, {pipeline_mode = #tpu.pipeline_mode<synchronous>, transform_indices = @transform_18, window_bounds = array<i64: 32, 128>}, {pipeline_mode = #tpu.pipeline_mode<synchronous>, transform_indices = @transform_19, window_bounds = array<i64: 32, 128>}, {pipeline_mode = #tpu.pipeline_mode<synchronous>, transform_indices = @transform_20, window_bounds = array<i64: 32, 128>}, {pipeline_mode = #tpu.pipeline_mode<synchronous>, transform_indices = @transform_21, window_bounds = array<i64: 32, 128>}, {pipeline_mode = #tpu.pipeline_mode<synchronous>, transform_indices = @transform_22, window_bounds = array<i64: 1, 128>}, {pipeline_mode = #tpu.pipeline_mode<synchronous>, transform_indices = @transform_23, window_bounds = array<i64: 128, 128>}, {pipeline_mode = #tpu.pipeline_mode<synchronous>, transform_indices = @transform_24, window_bounds = array<i64: 1, 128>}, {transform_indices = @transform_25, window_bounds = array<i64: 1, 8, 128>}]} {
    %0 = arith.index_cast %arg0 : i32 to index
    %1 = memref.load %arg1[%0] : memref<2xi32, #tpu.memory_space<smem>>
    %2 = arith.index_cast %arg0 : i32 to index
    %3 = memref.load %arg2[%2] : memref<2xi32, #tpu.memory_space<smem>>
    %c0 = arith.constant 0 : index
    %c0_0 = arith.constant 0 : index
    %c0_1 = arith.constant 0 : index
    %4 = vector.load %arg3[%c0, %c0_0, %c0_1] : memref<1x16x4xf32, #tpu.memory_space<vmem>>, vector<1x16x4xf32>
    %5 = vector.shape_cast %4 : vector<1x16x4xf32> to vector<16x4xf32>
    %c0_2 = arith.constant 0 : index
    %c0_3 = arith.constant 0 : index
    %c0_4 = arith.constant 0 : index
    %6 = vector.load %arg4[%c0_2, %c0_3, %c0_4] : memref<1x16x16xbf16, #tpu.memory_space<vmem>>, vector<1x16x16xbf16>
    %7 = vector.shape_cast %6 : vector<1x16x16xbf16> to vector<16x16xbf16>
    %c0_5 = arith.constant 0 : index
    %c0_6 = arith.constant 0 : index
    %8 = vector.load %arg25[%c0_5, %c0_6] : memref<1x128xf32, #tpu.memory_space<vmem>>, vector<1x128xf32>
    %9 = arith.truncf %5 : vector<16x4xf32> to vector<16x4xbf16>
    %c0_7 = arith.constant 0 : index
    %c0_8 = arith.constant 0 : index
    %10 = vector.load %arg5[%c0_7, %c0_8] : memref<4x32xbf16, #tpu.memory_space<vmem>>, vector<4x32xbf16>
    %cst = arith.constant dense<0.000000e+00> : vector<16x32xf32>
    %11 = tpu.matmul %9, %10, %cst {dimension_numbers = #tpu.dot_dimension_numbers<[1], [0], [0], [1], [0, 0, 1, 1], [], []>} : vector<16x4xbf16>, vector<4x32xbf16>, vector<16x32xf32> -> vector<16x32xf32>
    %cst_9 = arith.constant dense<0.000000e+00> : vector<16x4xf32>
    %12 = tpu.matmul %7, %9, %cst_9 {dimension_numbers = #tpu.dot_dimension_numbers<[1], [0], [0], [1], [0, 0, 1, 1], [], []>} : vector<16x16xbf16>, vector<16x4xbf16>, vector<16x4xf32> -> vector<16x4xf32>
    %13 = arith.truncf %12 : vector<16x4xf32> to vector<16x4xbf16>
    %c0_10 = arith.constant 0 : index
    %c0_11 = arith.constant 0 : index
    %c0_12 = arith.constant 0 : index
    %14 = vector.load %arg6[%c0_10, %c0_11, %c0_12] : memref<1x4x32xbf16, #tpu.memory_space<vmem>>, vector<1x4x32xbf16>
    %15 = vector.shape_cast %14 : vector<1x4x32xbf16> to vector<4x32xbf16>
    %cst_13 = arith.constant dense<0.000000e+00> : vector<16x32xf32>
    %16 = tpu.matmul %13, %15, %cst_13 {dimension_numbers = #tpu.dot_dimension_numbers<[1], [0], [0], [1], [0, 0, 1, 1], [], []>} : vector<16x4xbf16>, vector<4x32xbf16>, vector<16x32xf32> -> vector<16x32xf32>
    %17 = arith.addf %11, %16 : vector<16x32xf32>
    %c0_14 = arith.constant 0 : index
    %c0_15 = arith.constant 0 : index
    %18 = vector.load %arg7[%c0_14, %c0_15] : memref<1x32xf32, #tpu.memory_space<vmem>>, vector<1x32xf32>
    %19 = vector.broadcast %18 : vector<1x32xf32> to vector<16x32xf32>
    %20 = arith.addf %17, %19 : vector<16x32xf32>
    %21 = math.tanh %20 : vector<16x32xf32>
    %c0_16 = arith.constant 0 : index
    %c0_17 = arith.constant 0 : index
    %22 = vector.load %arg29[%c0_16, %c0_17] : memref<16x32xf32, #tpu.memory_space<vmem>>, vector<16x32xf32>
    tpu.vector_store %arg29[%c0_16, %c0_17], %21 {strides = array<i32>} : memref<16x32xf32, #tpu.memory_space<vmem>>, vector<16x32xf32>,
    %23 = arith.index_cast %1 : i32 to index
    %c0_18 = arith.constant 0 : index
    %24 = vector.load %arg29[%23, %c0_18] : memref<16x32xf32, #tpu.memory_space<vmem>>, vector<1x32xf32>
    %25 = arith.truncf %24 : vector<1x32xf32> to vector<1x32xbf16>
    %26 = arith.index_cast %3 : i32 to index
    %c0_19 = arith.constant 0 : index
    %27 = vector.load %arg29[%26, %c0_19] : memref<16x32xf32, #tpu.memory_space<vmem>>, vector<1x32xf32>
    %28 = arith.truncf %27 : vector<1x32xf32> to vector<1x32xbf16>
    %c0_20 = arith.constant 0 : index
    %c0_21 = arith.constant 0 : index
    %29 = vector.load %arg17[%c0_20, %c0_21] : memref<32x128xbf16, #tpu.memory_space<vmem>>, vector<32x128xbf16>
    %cst_22 = arith.constant dense<0.000000e+00> : vector<1x128xf32>
    %30 = tpu.matmul %25, %29, %cst_22 {dimension_numbers = #tpu.dot_dimension_numbers<[1], [0], [0], [1], [0, 0, 1, 1], [], []>} : vector<1x32xbf16>, vector<32x128xbf16>, vector<1x128xf32> -> vector<1x128xf32>
    %31 = arith.addf %8, %30 : vector<1x128xf32>
    %c0_23 = arith.constant 0 : index
    %c0_24 = arith.constant 0 : index
    %32 = vector.load %arg21[%c0_23, %c0_24] : memref<32x128xbf16, #tpu.memory_space<vmem>>, vector<32x128xbf16>
    %cst_25 = arith.constant dense<0.000000e+00> : vector<1x128xf32>
    %33 = tpu.matmul %28, %32, %cst_25 {dimension_numbers = #tpu.dot_dimension_numbers<[1], [0], [0], [1], [0, 0, 1, 1], [], []>} : vector<1x32xbf16>, vector<32x128xbf16>, vector<1x128xf32> -> vector<1x128xf32>
    %34 = arith.addf %31, %33 : vector<1x128xf32>
    %35 = arith.truncf %21 : vector<16x32xf32> to vector<16x32xbf16>
    %c0_26 = arith.constant 0 : index
    %c0_27 = arith.constant 0 : index
    %36 = vector.load %arg8[%c0_26, %c0_27] : memref<32x32xbf16, #tpu.memory_space<vmem>>, vector<32x32xbf16>
    %cst_28 = arith.constant dense<0.000000e+00> : vector<16x32xf32>
    %37 = tpu.matmul %35, %36, %cst_28 {dimension_numbers = #tpu.dot_dimension_numbers<[1], [0], [0], [1], [0, 0, 1, 1], [], []>} : vector<16x32xbf16>, vector<32x32xbf16>, vector<16x32xf32> -> vector<16x32xf32>
    %cst_29 = arith.constant dense<0.000000e+00> : vector<16x32xf32>
    %38 = tpu.matmul %7, %35, %cst_29 {dimension_numbers = #tpu.dot_dimension_numbers<[1], [0], [0], [1], [0, 0, 1, 1], [], []>} : vector<16x16xbf16>, vector<16x32xbf16>, vector<16x32xf32> -> vector<16x32xf32>
    %39 = arith.truncf %38 : vector<16x32xf32> to vector<16x32xbf16>
    %c0_30 = arith.constant 0 : index
    %c0_31 = arith.constant 0 : index
    %c0_32 = arith.constant 0 : index
    %40 = vector.load %arg9[%c0_30, %c0_31, %c0_32] : memref<1x32x32xbf16, #tpu.memory_space<vmem>>, vector<1x32x32xbf16>
    %41 = vector.shape_cast %40 : vector<1x32x32xbf16> to vector<32x32xbf16>
    %cst_33 = arith.constant dense<0.000000e+00> : vector<16x32xf32>
    %42 = tpu.matmul %39, %41, %cst_33 {dimension_numbers = #tpu.dot_dimension_numbers<[1], [0], [0], [1], [0, 0, 1, 1], [], []>} : vector<16x32xbf16>, vector<32x32xbf16>, vector<16x32xf32> -> vector<16x32xf32>
    %43 = arith.addf %37, %42 : vector<16x32xf32>
    %c0_34 = arith.constant 0 : index
    %c0_35 = arith.constant 0 : index
    %44 = vector.load %arg10[%c0_34, %c0_35] : memref<1x32xf32, #tpu.memory_space<vmem>>, vector<1x32xf32>
    %45 = vector.broadcast %44 : vector<1x32xf32> to vector<16x32xf32>
    %46 = arith.addf %43, %45 : vector<16x32xf32>
    %47 = math.tanh %46 : vector<16x32xf32>
    %c0_36 = arith.constant 0 : index
    %c0_37 = arith.constant 0 : index
    %48 = vector.load %arg29[%c0_36, %c0_37] : memref<16x32xf32, #tpu.memory_space<vmem>>, vector<16x32xf32>
    tpu.vector_store %arg29[%c0_36, %c0_37], %47 {strides = array<i32>} : memref<16x32xf32, #tpu.memory_space<vmem>>, vector<16x32xf32>,
    %49 = arith.index_cast %1 : i32 to index
    %c0_38 = arith.constant 0 : index
    %50 = vector.load %arg29[%49, %c0_38] : memref<16x32xf32, #tpu.memory_space<vmem>>, vector<1x32xf32>
    %51 = arith.truncf %50 : vector<1x32xf32> to vector<1x32xbf16>
    %52 = arith.index_cast %3 : i32 to index
    %c0_39 = arith.constant 0 : index
    %53 = vector.load %arg29[%52, %c0_39] : memref<16x32xf32, #tpu.memory_space<vmem>>, vector<1x32xf32>
    %54 = arith.truncf %53 : vector<1x32xf32> to vector<1x32xbf16>
    %c0_40 = arith.constant 0 : index
    %c0_41 = arith.constant 0 : index
    %55 = vector.load %arg18[%c0_40, %c0_41] : memref<32x128xbf16, #tpu.memory_space<vmem>>, vector<32x128xbf16>
    %cst_42 = arith.constant dense<0.000000e+00> : vector<1x128xf32>
    %56 = tpu.matmul %51, %55, %cst_42 {dimension_numbers = #tpu.dot_dimension_numbers<[1], [0], [0], [1], [0, 0, 1, 1], [], []>} : vector<1x32xbf16>, vector<32x128xbf16>, vector<1x128xf32> -> vector<1x128xf32>
    %57 = arith.addf %34, %56 : vector<1x128xf32>
    %c0_43 = arith.constant 0 : index
    %c0_44 = arith.constant 0 : index
    %58 = vector.load %arg22[%c0_43, %c0_44] : memref<32x128xbf16, #tpu.memory_space<vmem>>, vector<32x128xbf16>
    %cst_45 = arith.constant dense<0.000000e+00> : vector<1x128xf32>
    %59 = tpu.matmul %54, %58, %cst_45 {dimension_numbers = #tpu.dot_dimension_numbers<[1], [0], [0], [1], [0, 0, 1, 1], [], []>} : vector<1x32xbf16>, vector<32x128xbf16>, vector<1x128xf32> -> vector<1x128xf32>
    %60 = arith.addf %57, %59 : vector<1x128xf32>
    %61 = arith.truncf %47 : vector<16x32xf32> to vector<16x32xbf16>
    %c0_46 = arith.constant 0 : index
    %c0_47 = arith.constant 0 : index
    %62 = vector.load %arg11[%c0_46, %c0_47] : memref<32x32xbf16, #tpu.memory_space<vmem>>, vector<32x32xbf16>
    %cst_48 = arith.constant dense<0.000000e+00> : vector<16x32xf32>
    %63 = tpu.matmul %61, %62, %cst_48 {dimension_numbers = #tpu.dot_dimension_numbers<[1], [0], [0], [1], [0, 0, 1, 1], [], []>} : vector<16x32xbf16>, vector<32x32xbf16>, vector<16x32xf32> -> vector<16x32xf32>
    %cst_49 = arith.constant dense<0.000000e+00> : vector<16x32xf32>
    %64 = tpu.matmul %7, %61, %cst_49 {dimension_numbers = #tpu.dot_dimension_numbers<[1], [0], [0], [1], [0, 0, 1, 1], [], []>} : vector<16x16xbf16>, vector<16x32xbf16>, vector<16x32xf32> -> vector<16x32xf32>
    %65 = arith.truncf %64 : vector<16x32xf32> to vector<16x32xbf16>
    %c0_50 = arith.constant 0 : index
    %c0_51 = arith.constant 0 : index
    %c0_52 = arith.constant 0 : index
    %66 = vector.load %arg12[%c0_50, %c0_51, %c0_52] : memref<1x32x32xbf16, #tpu.memory_space<vmem>>, vector<1x32x32xbf16>
    %67 = vector.shape_cast %66 : vector<1x32x32xbf16> to vector<32x32xbf16>
    %cst_53 = arith.constant dense<0.000000e+00> : vector<16x32xf32>
    %68 = tpu.matmul %65, %67, %cst_53 {dimension_numbers = #tpu.dot_dimension_numbers<[1], [0], [0], [1], [0, 0, 1, 1], [], []>} : vector<16x32xbf16>, vector<32x32xbf16>, vector<16x32xf32> -> vector<16x32xf32>
    %69 = arith.addf %63, %68 : vector<16x32xf32>
    %c0_54 = arith.constant 0 : index
    %c0_55 = arith.constant 0 : index
    %70 = vector.load %arg13[%c0_54, %c0_55] : memref<1x32xf32, #tpu.memory_space<vmem>>, vector<1x32xf32>
    %71 = vector.broadcast %70 : vector<1x32xf32> to vector<16x32xf32>
    %72 = arith.addf %69, %71 : vector<16x32xf32>
    %73 = math.tanh %72 : vector<16x32xf32>
    %c0_56 = arith.constant 0 : index
    %c0_57 = arith.constant 0 : index
    %74 = vector.load %arg29[%c0_56, %c0_57] : memref<16x32xf32, #tpu.memory_space<vmem>>, vector<16x32xf32>
    tpu.vector_store %arg29[%c0_56, %c0_57], %73 {strides = array<i32>} : memref<16x32xf32, #tpu.memory_space<vmem>>, vector<16x32xf32>,
    %75 = arith.index_cast %1 : i32 to index
    %c0_58 = arith.constant 0 : index
    %76 = vector.load %arg29[%75, %c0_58] : memref<16x32xf32, #tpu.memory_space<vmem>>, vector<1x32xf32>
    %77 = arith.truncf %76 : vector<1x32xf32> to vector<1x32xbf16>
    %78 = arith.index_cast %3 : i32 to index
    %c0_59 = arith.constant 0 : index
    %79 = vector.load %arg29[%78, %c0_59] : memref<16x32xf32, #tpu.memory_space<vmem>>, vector<1x32xf32>
    %80 = arith.truncf %79 : vector<1x32xf32> to vector<1x32xbf16>
    %c0_60 = arith.constant 0 : index
    %c0_61 = arith.constant 0 : index
    %81 = vector.load %arg19[%c0_60, %c0_61] : memref<32x128xbf16, #tpu.memory_space<vmem>>, vector<32x128xbf16>
    %cst_62 = arith.constant dense<0.000000e+00> : vector<1x128xf32>
    %82 = tpu.matmul %77, %81, %cst_62 {dimension_numbers = #tpu.dot_dimension_numbers<[1], [0], [0], [1], [0, 0, 1, 1], [], []>} : vector<1x32xbf16>, vector<32x128xbf16>, vector<1x128xf32> -> vector<1x128xf32>
    %83 = arith.addf %60, %82 : vector<1x128xf32>
    %c0_63 = arith.constant 0 : index
    %c0_64 = arith.constant 0 : index
    %84 = vector.load %arg23[%c0_63, %c0_64] : memref<32x128xbf16, #tpu.memory_space<vmem>>, vector<32x128xbf16>
    %cst_65 = arith.constant dense<0.000000e+00> : vector<1x128xf32>
    %85 = tpu.matmul %80, %84, %cst_65 {dimension_numbers = #tpu.dot_dimension_numbers<[1], [0], [0], [1], [0, 0, 1, 1], [], []>} : vector<1x32xbf16>, vector<32x128xbf16>, vector<1x128xf32> -> vector<1x128xf32>
    %86 = arith.addf %83, %85 : vector<1x128xf32>
    %87 = arith.truncf %73 : vector<16x32xf32> to vector<16x32xbf16>
    %c0_66 = arith.constant 0 : index
    %c0_67 = arith.constant 0 : index
    %88 = vector.load %arg14[%c0_66, %c0_67] : memref<32x32xbf16, #tpu.memory_space<vmem>>, vector<32x32xbf16>
    %cst_68 = arith.constant dense<0.000000e+00> : vector<16x32xf32>
    %89 = tpu.matmul %87, %88, %cst_68 {dimension_numbers = #tpu.dot_dimension_numbers<[1], [0], [0], [1], [0, 0, 1, 1], [], []>} : vector<16x32xbf16>, vector<32x32xbf16>, vector<16x32xf32> -> vector<16x32xf32>
    %cst_69 = arith.constant dense<0.000000e+00> : vector<16x32xf32>
    %90 = tpu.matmul %7, %87, %cst_69 {dimension_numbers = #tpu.dot_dimension_numbers<[1], [0], [0], [1], [0, 0, 1, 1], [], []>} : vector<16x16xbf16>, vector<16x32xbf16>, vector<16x32xf32> -> vector<16x32xf32>
    %91 = arith.truncf %90 : vector<16x32xf32> to vector<16x32xbf16>
    %c0_70 = arith.constant 0 : index
    %c0_71 = arith.constant 0 : index
    %c0_72 = arith.constant 0 : index
    %92 = vector.load %arg15[%c0_70, %c0_71, %c0_72] : memref<1x32x32xbf16, #tpu.memory_space<vmem>>, vector<1x32x32xbf16>
    %93 = vector.shape_cast %92 : vector<1x32x32xbf16> to vector<32x32xbf16>
    %cst_73 = arith.constant dense<0.000000e+00> : vector<16x32xf32>
    %94 = tpu.matmul %91, %93, %cst_73 {dimension_numbers = #tpu.dot_dimension_numbers<[1], [0], [0], [1], [0, 0, 1, 1], [], []>} : vector<16x32xbf16>, vector<32x32xbf16>, vector<16x32xf32> -> vector<16x32xf32>
    %95 = arith.addf %89, %94 : vector<16x32xf32>
    %c0_74 = arith.constant 0 : index
    %c0_75 = arith.constant 0 : index
    %96 = vector.load %arg16[%c0_74, %c0_75] : memref<1x32xf32, #tpu.memory_space<vmem>>, vector<1x32xf32>
    %97 = vector.broadcast %96 : vector<1x32xf32> to vector<16x32xf32>
    %98 = arith.addf %95, %97 : vector<16x32xf32>
    %99 = math.tanh %98 : vector<16x32xf32>
    %c0_76 = arith.constant 0 : index
    %c0_77 = arith.constant 0 : index
    %100 = vector.load %arg29[%c0_76, %c0_77] : memref<16x32xf32, #tpu.memory_space<vmem>>, vector<16x32xf32>
    tpu.vector_store %arg29[%c0_76, %c0_77], %99 {strides = array<i32>} : memref<16x32xf32, #tpu.memory_space<vmem>>, vector<16x32xf32>,
    %101 = arith.index_cast %1 : i32 to index
    %c0_78 = arith.constant 0 : index
    %102 = vector.load %arg29[%101, %c0_78] : memref<16x32xf32, #tpu.memory_space<vmem>>, vector<1x32xf32>
    %103 = arith.truncf %102 : vector<1x32xf32> to vector<1x32xbf16>
    %104 = arith.index_cast %3 : i32 to index
    %c0_79 = arith.constant 0 : index
    %105 = vector.load %arg29[%104, %c0_79] : memref<16x32xf32, #tpu.memory_space<vmem>>, vector<1x32xf32>
    %106 = arith.truncf %105 : vector<1x32xf32> to vector<1x32xbf16>
    %c0_80 = arith.constant 0 : index
    %c0_81 = arith.constant 0 : index
    %107 = vector.load %arg20[%c0_80, %c0_81] : memref<32x128xbf16, #tpu.memory_space<vmem>>, vector<32x128xbf16>
    %cst_82 = arith.constant dense<0.000000e+00> : vector<1x128xf32>
    %108 = tpu.matmul %103, %107, %cst_82 {dimension_numbers = #tpu.dot_dimension_numbers<[1], [0], [0], [1], [0, 0, 1, 1], [], []>} : vector<1x32xbf16>, vector<32x128xbf16>, vector<1x128xf32> -> vector<1x128xf32>
    %109 = arith.addf %86, %108 : vector<1x128xf32>
    %c0_83 = arith.constant 0 : index
    %c0_84 = arith.constant 0 : index
    %110 = vector.load %arg24[%c0_83, %c0_84] : memref<32x128xbf16, #tpu.memory_space<vmem>>, vector<32x128xbf16>
    %cst_85 = arith.constant dense<0.000000e+00> : vector<1x128xf32>
    %111 = tpu.matmul %106, %110, %cst_85 {dimension_numbers = #tpu.dot_dimension_numbers<[1], [0], [0], [1], [0, 0, 1, 1], [], []>} : vector<1x32xbf16>, vector<32x128xbf16>, vector<1x128xf32> -> vector<1x128xf32>
    %112 = arith.addf %109, %111 : vector<1x128xf32>
    %cst_86 = arith.constant 0.000000e+00 : f32
    %113 = vector.broadcast %cst_86 : f32 to vector<1x128xf32>
    %114 = arith.maximumf %112, %113 : vector<1x128xf32>
    %115 = arith.truncf %114 : vector<1x128xf32> to vector<1x128xbf16>
    %c0_87 = arith.constant 0 : index
    %c0_88 = arith.constant 0 : index
    %116 = vector.load %arg26[%c0_87, %c0_88] : memref<128x128xbf16, #tpu.memory_space<vmem>>, vector<128x128xbf16>
    %cst_89 = arith.constant dense<0.000000e+00> : vector<1x128xf32>
    %117 = tpu.matmul %115, %116, %cst_89 {dimension_numbers = #tpu.dot_dimension_numbers<[1], [0], [0], [1], [0, 0, 1, 1], [], []>} : vector<1x128xbf16>, vector<128x128xbf16>, vector<1x128xf32> -> vector<1x128xf32>
    %c0_90 = arith.constant 0 : index
    %c0_91 = arith.constant 0 : index
    %118 = vector.load %arg27[%c0_90, %c0_91] : memref<1x128xf32, #tpu.memory_space<vmem>>, vector<1x128xf32>
    %119 = arith.addf %117, %118 : vector<1x128xf32>
    %120 = vector.shape_cast %119 : vector<1x128xf32> to vector<1x128xf32>
    %121 = vector.broadcast %120 : vector<1x128xf32> to vector<8x128xf32>
    %c0_92 = arith.constant 0 : index
    %c0_93 = arith.constant 0 : index
    %c0_94 = arith.constant 0 : index
    %122 = vector.load %arg28[%c0_92, %c0_93, %c0_94] : memref<1x8x128xf32, #tpu.memory_space<vmem>>, vector<1x8x128xf32>
    %123 = vector.shape_cast %122 : vector<1x8x128xf32> to vector<8x128xf32>
    %124 = vector.shape_cast %121 : vector<8x128xf32> to vector<1x8x128xf32>
    tpu.vector_store %arg28[%c0_92, %c0_93, %c0_94], %124 {strides = array<i32>} : memref<1x8x128xf32, #tpu.memory_space<vmem>>, vector<1x8x128xf32>,
    return
  }
  func.func @transform_0(%arg0: i32, %arg1: memref<2xi32, #tpu.memory_space<smem>>, %arg2: memref<2xi32, #tpu.memory_space<smem>>) -> (i32, i32, i32) {
    %c0_i32 = arith.constant 0 : i32
    %c0_i32_0 = arith.constant 0 : i32
    %c0_i32_1 = arith.constant 0 : i32
    return %arg0, %c0_i32, %c0_i32_0 : i32, i32, i32
  }
  func.func @transform_1(%arg0: i32, %arg1: memref<2xi32, #tpu.memory_space<smem>>, %arg2: memref<2xi32, #tpu.memory_space<smem>>) -> (i32, i32, i32) {
    %c0_i32 = arith.constant 0 : i32
    %c0_i32_0 = arith.constant 0 : i32
    %c0_i32_1 = arith.constant 0 : i32
    return %arg0, %c0_i32, %c0_i32_0 : i32, i32, i32
  }
  func.func @transform_2(%arg0: i32, %arg1: memref<2xi32, #tpu.memory_space<smem>>, %arg2: memref<2xi32, #tpu.memory_space<smem>>) -> (i32, i32) {
    %c0_i32 = arith.constant 0 : i32
    %c0_i32_0 = arith.constant 0 : i32
    %c0_i32_1 = arith.constant 0 : i32
    return %c0_i32, %c0_i32_0 : i32, i32
  }
  func.func @transform_3(%arg0: i32, %arg1: memref<2xi32, #tpu.memory_space<smem>>, %arg2: memref<2xi32, #tpu.memory_space<smem>>) -> (i32, i32, i32) {
    %c0_i32 = arith.constant 0 : i32
    %c0_i32_0 = arith.constant 0 : i32
    %c0_i32_1 = arith.constant 0 : i32
    %c0_i32_2 = arith.constant 0 : i32
    return %c0_i32, %c0_i32_0, %c0_i32_1 : i32, i32, i32
  }
  func.func @transform_4(%arg0: i32, %arg1: memref<2xi32, #tpu.memory_space<smem>>, %arg2: memref<2xi32, #tpu.memory_space<smem>>) -> (i32, i32) {
    %c0_i32 = arith.constant 0 : i32
    %c0_i32_0 = arith.constant 0 : i32
    %c0_i32_1 = arith.constant 0 : i32
    return %c0_i32, %c0_i32_0 : i32, i32
  }
  func.func @transform_5(%arg0: i32, %arg1: memref<2xi32, #tpu.memory_space<smem>>, %arg2: memref<2xi32, #tpu.memory_space<smem>>) -> (i32, i32) {
    %c0_i32 = arith.constant 0 : i32
    %c0_i32_0 = arith.constant 0 : i32
    %c0_i32_1 = arith.constant 0 : i32
    return %c0_i32, %c0_i32_0 : i32, i32
  }
  func.func @transform_6(%arg0: i32, %arg1: memref<2xi32, #tpu.memory_space<smem>>, %arg2: memref<2xi32, #tpu.memory_space<smem>>) -> (i32, i32, i32) {
    %c0_i32 = arith.constant 0 : i32
    %c0_i32_0 = arith.constant 0 : i32
    %c0_i32_1 = arith.constant 0 : i32
    %c0_i32_2 = arith.constant 0 : i32
    return %c0_i32, %c0_i32_0, %c0_i32_1 : i32, i32, i32
  }
  func.func @transform_7(%arg0: i32, %arg1: memref<2xi32, #tpu.memory_space<smem>>, %arg2: memref<2xi32, #tpu.memory_space<smem>>) -> (i32, i32) {
    %c0_i32 = arith.constant 0 : i32
    %c0_i32_0 = arith.constant 0 : i32
    %c0_i32_1 = arith.constant 0 : i32
    return %c0_i32, %c0_i32_0 : i32, i32
  }
  func.func @transform_8(%arg0: i32, %arg1: memref<2xi32, #tpu.memory_space<smem>>, %arg2: memref<2xi32, #tpu.memory_space<smem>>) -> (i32, i32) {
    %c0_i32 = arith.constant 0 : i32
    %c0_i32_0 = arith.constant 0 : i32
    %c0_i32_1 = arith.constant 0 : i32
    return %c0_i32, %c0_i32_0 : i32, i32
  }
  func.func @transform_9(%arg0: i32, %arg1: memref<2xi32, #tpu.memory_space<smem>>, %arg2: memref<2xi32, #tpu.memory_space<smem>>) -> (i32, i32, i32) {
    %c0_i32 = arith.constant 0 : i32
    %c0_i32_0 = arith.constant 0 : i32
    %c0_i32_1 = arith.constant 0 : i32
    %c0_i32_2 = arith.constant 0 : i32
    return %c0_i32, %c0_i32_0, %c0_i32_1 : i32, i32, i32
  }
  func.func @transform_10(%arg0: i32, %arg1: memref<2xi32, #tpu.memory_space<smem>>, %arg2: memref<2xi32, #tpu.memory_space<smem>>) -> (i32, i32) {
    %c0_i32 = arith.constant 0 : i32
    %c0_i32_0 = arith.constant 0 : i32
    %c0_i32_1 = arith.constant 0 : i32
    return %c0_i32, %c0_i32_0 : i32, i32
  }
  func.func @transform_11(%arg0: i32, %arg1: memref<2xi32, #tpu.memory_space<smem>>, %arg2: memref<2xi32, #tpu.memory_space<smem>>) -> (i32, i32) {
    %c0_i32 = arith.constant 0 : i32
    %c0_i32_0 = arith.constant 0 : i32
    %c0_i32_1 = arith.constant 0 : i32
    return %c0_i32, %c0_i32_0 : i32, i32
  }
  func.func @transform_12(%arg0: i32, %arg1: memref<2xi32, #tpu.memory_space<smem>>, %arg2: memref<2xi32, #tpu.memory_space<smem>>) -> (i32, i32, i32) {
    %c0_i32 = arith.constant 0 : i32
    %c0_i32_0 = arith.constant 0 : i32
    %c0_i32_1 = arith.constant 0 : i32
    %c0_i32_2 = arith.constant 0 : i32
    return %c0_i32, %c0_i32_0, %c0_i32_1 : i32, i32, i32
  }
  func.func @transform_13(%arg0: i32, %arg1: memref<2xi32, #tpu.memory_space<smem>>, %arg2: memref<2xi32, #tpu.memory_space<smem>>) -> (i32, i32) {
    %c0_i32 = arith.constant 0 : i32
    %c0_i32_0 = arith.constant 0 : i32
    %c0_i32_1 = arith.constant 0 : i32
    return %c0_i32, %c0_i32_0 : i32, i32
  }
  func.func @transform_14(%arg0: i32, %arg1: memref<2xi32, #tpu.memory_space<smem>>, %arg2: memref<2xi32, #tpu.memory_space<smem>>) -> (i32, i32) {
    %c0_i32 = arith.constant 0 : i32
    %c0_i32_0 = arith.constant 0 : i32
    %c0_i32_1 = arith.constant 0 : i32
    return %c0_i32, %c0_i32_0 : i32, i32
  }
  func.func @transform_15(%arg0: i32, %arg1: memref<2xi32, #tpu.memory_space<smem>>, %arg2: memref<2xi32, #tpu.memory_space<smem>>) -> (i32, i32) {
    %c0_i32 = arith.constant 0 : i32
    %c0_i32_0 = arith.constant 0 : i32
    %c0_i32_1 = arith.constant 0 : i32
    return %c0_i32, %c0_i32_0 : i32, i32
  }
  func.func @transform_16(%arg0: i32, %arg1: memref<2xi32, #tpu.memory_space<smem>>, %arg2: memref<2xi32, #tpu.memory_space<smem>>) -> (i32, i32) {
    %c0_i32 = arith.constant 0 : i32
    %c0_i32_0 = arith.constant 0 : i32
    %c0_i32_1 = arith.constant 0 : i32
    return %c0_i32, %c0_i32_0 : i32, i32
  }
  func.func @transform_17(%arg0: i32, %arg1: memref<2xi32, #tpu.memory_space<smem>>, %arg2: memref<2xi32, #tpu.memory_space<smem>>) -> (i32, i32) {
    %c0_i32 = arith.constant 0 : i32
    %c0_i32_0 = arith.constant 0 : i32
    %c0_i32_1 = arith.constant 0 : i32
    return %c0_i32, %c0_i32_0 : i32, i32
  }
  func.func @transform_18(%arg0: i32, %arg1: memref<2xi32, #tpu.memory_space<smem>>, %arg2: memref<2xi32, #tpu.memory_space<smem>>) -> (i32, i32) {
    %c0_i32 = arith.constant 0 : i32
    %c0_i32_0 = arith.constant 0 : i32
    %c0_i32_1 = arith.constant 0 : i32
    return %c0_i32, %c0_i32_0 : i32, i32
  }
  func.func @transform_19(%arg0: i32, %arg1: memref<2xi32, #tpu.memory_space<smem>>, %arg2: memref<2xi32, #tpu.memory_space<smem>>) -> (i32, i32) {
    %c0_i32 = arith.constant 0 : i32
    %c0_i32_0 = arith.constant 0 : i32
    %c0_i32_1 = arith.constant 0 : i32
    return %c0_i32, %c0_i32_0 : i32, i32
  }
  func.func @transform_20(%arg0: i32, %arg1: memref<2xi32, #tpu.memory_space<smem>>, %arg2: memref<2xi32, #tpu.memory_space<smem>>) -> (i32, i32) {
    %c0_i32 = arith.constant 0 : i32
    %c0_i32_0 = arith.constant 0 : i32
    %c0_i32_1 = arith.constant 0 : i32
    return %c0_i32, %c0_i32_0 : i32, i32
  }
  func.func @transform_21(%arg0: i32, %arg1: memref<2xi32, #tpu.memory_space<smem>>, %arg2: memref<2xi32, #tpu.memory_space<smem>>) -> (i32, i32) {
    %c0_i32 = arith.constant 0 : i32
    %c0_i32_0 = arith.constant 0 : i32
    %c0_i32_1 = arith.constant 0 : i32
    return %c0_i32, %c0_i32_0 : i32, i32
  }
  func.func @transform_22(%arg0: i32, %arg1: memref<2xi32, #tpu.memory_space<smem>>, %arg2: memref<2xi32, #tpu.memory_space<smem>>) -> (i32, i32) {
    %c0_i32 = arith.constant 0 : i32
    %c0_i32_0 = arith.constant 0 : i32
    %c0_i32_1 = arith.constant 0 : i32
    return %c0_i32, %c0_i32_0 : i32, i32
  }
  func.func @transform_23(%arg0: i32, %arg1: memref<2xi32, #tpu.memory_space<smem>>, %arg2: memref<2xi32, #tpu.memory_space<smem>>) -> (i32, i32) {
    %c0_i32 = arith.constant 0 : i32
    %c0_i32_0 = arith.constant 0 : i32
    %c0_i32_1 = arith.constant 0 : i32
    return %c0_i32, %c0_i32_0 : i32, i32
  }
  func.func @transform_24(%arg0: i32, %arg1: memref<2xi32, #tpu.memory_space<smem>>, %arg2: memref<2xi32, #tpu.memory_space<smem>>) -> (i32, i32) {
    %c0_i32 = arith.constant 0 : i32
    %c0_i32_0 = arith.constant 0 : i32
    %c0_i32_1 = arith.constant 0 : i32
    return %c0_i32, %c0_i32_0 : i32, i32
  }
  func.func @transform_25(%arg0: i32, %arg1: memref<2xi32, #tpu.memory_space<smem>>, %arg2: memref<2xi32, #tpu.memory_space<smem>>) -> (i32, i32, i32) {
    %c0_i32 = arith.constant 0 : i32
    %c0_i32_0 = arith.constant 0 : i32
    %c0_i32_1 = arith.constant 0 : i32
    return %arg0, %c0_i32, %c0_i32_0 : i32, i32, i32
  }
}

</mosaic_0001>

<llo_original>
// kernel: tpu_custom_call.1
$region0: #{tpu_custom_call.1}
  #allocation0 [shape = 'u32[]', space=smem, size = 0x4, offset = 0x4, fixed_abs, tag = 'smem constant byte address 0x4 - core index']
  #allocation1 [shape = 'u32[144,128]{1,0:T(1,128)}', space=vmem, size = 0x12000, scoped, tag = 'internal scratch']
  #allocation2 [shape = 'f32[16,32]{1,0:T(8,128)}', space=vmem, size = 0x2000, scoped, tag = 'scratch operand']
  #allocation3 [shape = 's32[1]{0}', space=sflag, size = 0x4, scoped, tag = 'scoped memory for tpu_custom_call.1']
  #allocation4 [shape = 'u8[512]{0}', space=smem, size = 0x200, scoped, tag = 'prefetched SMEM operand 0']
  #allocation5 [shape = 'u8[512]{0}', space=smem, size = 0x200, scoped, tag = 'prefetched SMEM operand 1']
  %s0 = inlined_call_operand.vmem [shape: s32[2], index: 0, kind: input, shape index: {}]
  %s1 = inlined_call_operand.hbm [shape: s32[2], index: 1, kind: input, shape index: {}]
  %s2 = inlined_call_operand.vmem [shape: f32[2,16,4], index: 2, kind: input, shape index: {}]
  %s3 = inlined_call_operand.vmem [shape: bf16[2,16,16], index: 3, kind: input, shape index: {}]
  %s4 = inlined_call_operand.vmem [shape: bf16[4,32], index: 4, kind: input, shape index: {}]
  %s5 = inlined_call_operand.vmem [shape: bf16[1,4,32], index: 5, kind: input, shape index: {}]
  %s6 = inlined_call_operand.vmem [shape: f32[1,32], index: 6, kind: input, shape index: {}]
  %s7 = inlined_call_operand.vmem [shape: bf16[32,32], index: 7, kind: input, shape index: {}]
  %s8 = inlined_call_operand.vmem [shape: bf16[1,32,32], index: 8, kind: input, shape index: {}]
  %s9 = inlined_call_operand.vmem [shape: f32[1,32], index: 9, kind: input, shape index: {}]
  %s10 = inlined_call_operand.hbm [shape: bf16[32,32], index: 10, kind: input, shape index: {}]
  %s11 = inlined_call_operand.hbm [shape: bf16[1,32,32], index: 11, kind: input, shape index: {}]
  %s12 = inlined_call_operand.vmem [shape: f32[1,32], index: 12, kind: input, shape index: {}]
  %s13 = inlined_call_operand.hbm [shape: bf16[32,32], index: 13, kind: input, shape index: {}]
  %s14 = inlined_call_operand.hbm [shape: bf16[1,32,32], index: 14, kind: input, shape index: {}]
  %s15 = inlined_call_operand.vmem [shape: f32[1,32], index: 15, kind: input, shape index: {}]
  %s16 = inlined_call_operand.hbm [shape: bf16[32,128], index: 16, kind: input, shape index: {}]
  %s17 = inlined_call_operand.hbm [shape: bf16[32,128], index: 17, kind: input, shape index: {}]
  %s18 = inlined_call_operand.hbm [shape: bf16[32,128], index: 18, kind: input, shape index: {}]
  %s19 = inlined_call_operand.hbm [shape: bf16[32,128], index: 19, kind: input, shape index: {}]
  %s20 = inlined_call_operand.hbm [shape: bf16[32,128], index: 20, kind: input, shape index: {}]
  %s21 = inlined_call_operand.hbm [shape: bf16[32,128], index: 21, kind: input, shape index: {}]
  %s22 = inlined_call_operand.hbm [shape: bf16[32,128], index: 22, kind: input, shape index: {}]
  %s23 = inlined_call_operand.hbm [shape: bf16[32,128], index: 23, kind: input, shape index: {}]
  %s24 = inlined_call_operand.vmem [shape: f32[1,128], index: 24, kind: input, shape index: {}]
  %s25 = inlined_call_operand.vmem [shape: bf16[128,128], index: 25, kind: input, shape index: {}]
  %s26 = inlined_call_operand.vmem [shape: f32[1,128], index: 26, kind: input, shape index: {}]
  %s27 = inlined_call_operand.hbm [shape: f32[2,8,128], index: 27, kind: output, shape index: {}]
  %s28 = sld [smem:[#allocation0]]
  $region181: #{tpu_custom_call.1} parent=0
    _
  %s30 = ssub.s32 1, %s28
  %s31 = scalar_select 0, %s30, %s28
  %s32 = sshll.u32 %s0, 4
  %s33 = int_to_ptr.vmem [resolvable:$true] %s32
  %35 = dma.vmem_to_smem %s33, 16, [#allocation4], [#allocation3]
  %37 = dma.hbm_to_smem %s1, 16, [#allocation5], [#allocation3]
  %38 = dma.done [#allocation3], 32
  %39 = sfence
  $region1: #{tpu_custom_call.1} parent=0
    #allocation6 [shape = 'u8[8192]{0}', space=vmem, size = 0x2000, scoped, tag = 'input window, operand 10, single buffered']
    #allocation7 [shape = 's32[2]{0}', space=sflag, size = 0x8, scoped, tag = 'scoped memory for tpu_custom_call.1']
    #allocation8 [shape = 's32[2]{0}', space=sflag, size = 0x8, scoped, tag = 'scoped memory for tpu_custom_call.1']
    #allocation9 [shape = 'u8[8192]{0}', space=vmem, size = 0x2000, scoped, tag = 'input window, operand 11, single buffered']
    #allocation10 [shape = 's32[1]{0}', space=sflag, size = 0x4, scoped, tag = 'scoped memory for tpu_custom_call.1']
    #allocation11 [shape = 'u8[8192]{0}', space=vmem, size = 0x2000, scoped, tag = 'input window, operand 13, single buffered']
    #allocation12 [shape = 'u8[8192]{0}', space=vmem, size = 0x2000, scoped, tag = 'input window, operand 14, single buffered']
    #allocation13 [shape = 's32[1]{0}', space=sflag, size = 0x4, scoped, tag = 'scoped memory for tpu_custom_call.1']
    #allocation14 [shape = 'u8[8192]{0}', space=vmem, size = 0x2000, scoped, tag = 'input window, operand 16, single buffered']
    #allocation15 [shape = 'u8[8192]{0}', space=vmem, size = 0x2000, scoped, tag = 'input window, operand 17, single buffered']
    #allocation16 [shape = 's32[1]{0}', space=sflag, size = 0x4, scoped, tag = 'scoped memory for tpu_custom_call.1']
    #allocation17 [shape = 'u8[8192]{0}', space=vmem, size = 0x2000, scoped, tag = 'input window, operand 18, single buffered']
    #allocation18 [shape = 'u8[8192]{0}', space=vmem, size = 0x2000, scoped, tag = 'input window, operand 19, single buffered']
    #allocation19 [shape = 's32[1]{0}', space=sflag, size = 0x4, scoped, tag = 'scoped memory for tpu_custom_call.1']
    #allocation20 [shape = 'u8[8192]{0}', space=vmem, size = 0x2000, scoped, tag = 'input window, operand 20, single buffered']
    #allocation21 [shape = 'u8[8192]{0}', space=vmem, size = 0x2000, scoped, tag = 'input window, operand 21, single buffered']
    #allocation22 [shape = 's32[1]{0}', space=sflag, size = 0x4, scoped, tag = 'scoped memory for tpu_custom_call.1']
    #allocation23 [shape = 'u8[8192]{0}', space=vmem, size = 0x2000, scoped, tag = 'input window, operand 22, single buffered']
    #allocation24 [shape = 'u8[8192]{0}', space=vmem, size = 0x2000, scoped, tag = 'input window, operand 23, single buffered']
    #allocation25 [shape = 's32[1]{0}', space=sflag, size = 0x4, scoped, tag = 'scoped memory for tpu_custom_call.1']
    #allocation26 [shape = 'u8[8192]{0}', space=vmem, size = 0x2000, scoped, tag = 'output window, operand 0']
    %40 = vsyncpa [#allocation7], 0
    %41 = vsyncpa [#allocation10], 0
    %42 = vsyncpa [#allocation13], 0
    %43 = vsyncpa [#allocation16], 0
    %44 = vsyncpa [#allocation19], 0
    %45 = vsyncpa [#allocation22], 0
    %46 = vsyncpa [#allocation25], 0
    %47 = vsyncpa [#allocation8], 0
    %s48 = scalar_lea.sflag [#allocation8], 1
    %49 = vsyncpa %s48, 0
    loop: start=0, step=1, limit=4
    $region2: #{tpu_custom_call.1} parent=1 // loop_pre_header
      _
    $region3: #{tpu_custom_call.1} parent=1 // loop_header
      %s51 = sphi 0, %s55
      %p52 = scmp.ge.s32.totalorder %s51, 4
      %s61 = sphi 0, %s63
      %s64 = sphi 0, %s61
      %s65 = sphi 0, %s64
      %s81 = sphi 0, %s65
      %s87 = sphi 0, %s89
      %s90 = sphi 0, %s87
      %s91 = sphi 0, %s90
      %s107 = sphi 0, %s91
      %s111 = sphi 0, %s111
      %s113 = sphi 0, %s111
      %s114 = sphi 0, %s113
      %s128 = sphi 0, %s114
      %s132 = sphi 0, %s132
      %s134 = sphi 0, %s132
      %s135 = sphi 0, %s134
      %s149 = sphi 0, %s135
      %s153 = sphi 0, %s153
      %s155 = sphi 0, %s153
      %s156 = sphi 0, %s155
      %s170 = sphi 0, %s156
      %s174 = sphi 0, %s174
      %s176 = sphi 0, %s174
      %s177 = sphi 0, %s176
      %s191 = sphi 0, %s177
      %s195 = sphi 0, %s195
      %s197 = sphi 0, %s195
      %s198 = sphi 0, %s197
      %s212 = sphi 0, %s198
      %s216 = sphi 0, %s216
      %s218 = sphi 0, %s216
      %s219 = sphi 0, %s218
      %s233 = sphi 0, %s219
      %s237 = sphi 0, %s237
      %s239 = sphi 0, %s237
      %s240 = sphi 0, %s239
      %s254 = sphi 0, %s240
      %s258 = sphi 0, %s258
      %s260 = sphi 0, %s258
      %s261 = sphi 0, %s260
      %s275 = sphi 0, %s261
      %s279 = sphi 0, %s279
      %s281 = sphi 0, %s279
      %s282 = sphi 0, %s281
      %s296 = sphi 0, %s282
      %s300 = sphi 0, %s300
      %s302 = sphi 0, %s300
      %s303 = sphi 0, %s302
      %s317 = sphi 0, %s303
      %s321 = sphi 0, %s321
      %s323 = sphi 0, %s321
      %s324 = sphi 0, %s323
      %s338 = sphi 0, %s324
      %s342 = sphi 0, %s342
      %s344 = sphi 0, %s342
      %s345 = sphi 0, %s344
      %s359 = sphi 0, %s345
      %s363 = sphi 0, %s363
      %s365 = sphi 0, %s363
      %s366 = sphi 0, %s365
      %s380 = sphi 0, %s366
      %s384 = sphi 0, %s384
      %s386 = sphi 0, %s384
      %s387 = sphi 0, %s386
      %s401 = sphi 0, %s387
      %s405 = sphi 0, %s405
      %s407 = sphi 0, %s405
      %s408 = sphi 0, %s407
      %s422 = sphi 0, %s408
      %s426 = sphi 0, %s426
      %s428 = sphi 0, %s426
      %s429 = sphi 0, %s428
      %s443 = sphi 0, %s429
      %s447 = sphi 0, %s447
      %s449 = sphi 0, %s447
      %s450 = sphi 0, %s449
      %s464 = sphi 0, %s450
      %s468 = sphi 0, %s468
      %s470 = sphi 0, %s468
      %s471 = sphi 0, %s470
      %s485 = sphi 0, %s471
      %s489 = sphi 0, %s489
      %s491 = sphi 0, %s489
      %s492 = sphi 0, %s491
      %s506 = sphi 0, %s492
      %s510 = sphi 0, %s510
      %s512 = sphi 0, %s510
      %s513 = sphi 0, %s512
      %s527 = sphi 0, %s513
      %s531 = sphi 0, %s531
      %s533 = sphi 0, %s531
      %s534 = sphi 0, %s533
      %s548 = sphi 0, %s534
      %s552 = sphi 0, %s552
      %s554 = sphi 0, %s552
      %s555 = sphi 0, %s554
      %s569 = sphi 0, %s555
      %s573 = sphi 0, %s573
      %s575 = sphi 0, %s573
      %s576 = sphi 0, %s575
      %s590 = sphi 0, %s576
      %s596 = sphi 0, %s598
      %s599 = sphi 0, %s596
      %s600 = sphi 0, %s599
      %s616 = sphi 0, %s600
    $region4: #{tpu_custom_call.1} parent=1 // loop_header_branch
      %54 = sbr.rel (%p52) target = $region8
    $region5: #{tpu_custom_call.1} parent=1 // loop_body
      %s56 = ssub.s32 %s51, 1
      %s57 = ssub.s32 %s51, 2
      %s58 = sadd.s32 %s51, 1
      %s59 = ssub.s32 %s51, %s58
      %p60 = scmp.eq.s32.totalorder %s59, 0
      %s62 = sadd.s32 %s61, 1
      %s63 = scalar_select %p60, %s61, %s62
      %p66 = pneg %p60
      %p67 = scmp.eq.s32.totalorder %s51, 1
      %p68 = por %p66, %p67
      %p69 = scmp.ne.s32.totalorder %s61, %s64
      %p70 = scmp.eq.s32.totalorder %s51, 0
      %p71 = por %p69, %p70
      %p72 = scmp.ne.s32.totalorder %s61, %s64
      %p73 = scmp.eq.s32.totalorder %s56, 1
      %p74 = por %p72, %p73
      %p75 = scmp.ne.s32.totalorder %s64, %s65
      %p76 = scmp.eq.s32.totalorder %s56, 0
      %p77 = por %p75, %p76
      %p78 = scmp.ne.s32.totalorder %s64, %s65
      %p79 = scmp.eq.s32.totalorder %s57, 1
      %p80 = por %p78, %p79
      %p82 = scmp.ne.s32.totalorder %s65, %s81
      %p83 = scmp.eq.s32.totalorder %s57, 0
      %p84 = por %p82, %p83
      %s85 = ssub.s32 %s51, %s58
      %p86 = scmp.eq.s32.totalorder %s85, 0
      %s88 = sadd.s32 %s87, 1
      %s89 = scalar_select %p86, %s87, %s88
      %p92 = pneg %p86
      %p93 = scmp.eq.s32.totalorder %s51, 1
      %p94 = por %p92, %p93
      %p95 = scmp.ne.s32.totalorder %s87, %s90
      %p96 = scmp.eq.s32.totalorder %s51, 0
      %p97 = por %p95, %p96
      %p98 = scmp.ne.s32.totalorder %s87, %s90
      %p99 = scmp.eq.s32.totalorder %s56, 1
      %p100 = por %p98, %p99
      %p101 = scmp.ne.s32.totalorder %s90, %s91
      %p102 = scmp.eq.s32.totalorder %s56, 0
      %p103 = por %p101, %p102
      %p104 = scmp.ne.s32.totalorder %s90, %s91
      %p105 = scmp.eq.s32.totalorder %s57, 1
      %p106 = por %p104, %p105
      %p108 = scmp.ne.s32.totalorder %s91, %s107
      %p109 = scmp.eq.s32.totalorder %s57, 0
      %p110 = por %p108, %p109
      %s112 = sadd.s32 %s111, 1
      %p115 = scmp.eq.s32.totalorder %s51, 1
      %p116 = scmp.ne.s32.totalorder %s111, %s113
      %p117 = scmp.eq.s32.totalorder %s51, 0
      %p118 = por %p116, %p117
      %p119 = scmp.ne.s32.totalorder %s111, %s113
      %p120 = scmp.eq.s32.totalorder %s56, 1
      %p121 = por %p119, %p120
      %p122 = scmp.ne.s32.totalorder %s113, %s114
      %p123 = scmp.eq.s32.totalorder %s56, 0
      %p124 = por %p122, %p123
      %p125 = scmp.ne.s32.totalorder %s113, %s114
      %p126 = scmp.eq.s32.totalorder %s57, 1
      %p127 = por %p125, %p126
      %p129 = scmp.ne.s32.totalorder %s114, %s128
      %p130 = scmp.eq.s32.totalorder %s57, 0
      %p131 = por %p129, %p130
      %s133 = sadd.s32 %s132, 1
      %p136 = scmp.eq.s32.totalorder %s51, 1
      %p137 = scmp.ne.s32.totalorder %s132, %s134
      %p138 = scmp.eq.s32.totalorder %s51, 0
      %p139 = por %p137, %p138
      %p140 = scmp.ne.s32.totalorder %s132, %s134
      %p141 = scmp.eq.s32.totalorder %s56, 1
      %p142 = por %p140, %p141
      %p143 = scmp.ne.s32.totalorder %s134, %s135
      %p144 = scmp.eq.s32.totalorder %s56, 0
      %p145 = por %p143, %p144
      %p146 = scmp.ne.s32.totalorder %s134, %s135
      %p147 = scmp.eq.s32.totalorder %s57, 1
      %p148 = por %p146, %p147
      %p150 = scmp.ne.s32.totalorder %s135, %s149
      %p151 = scmp.eq.s32.totalorder %s57, 0
      %p152 = por %p150, %p151
      %s154 = sadd.s32 %s153, 1
      %p157 = scmp.eq.s32.totalorder %s51, 1
      %p158 = scmp.ne.s32.totalorder %s153, %s155
      %p159 = scmp.eq.s32.totalorder %s51, 0
      %p160 = por %p158, %p159
      %p161 = scmp.ne.s32.totalorder %s153, %s155
      %p162 = scmp.eq.s32.totalorder %s56, 1
      %p163 = por %p161, %p162
      %p164 = scmp.ne.s32.totalorder %s155, %s156
      %p165 = scmp.eq.s32.totalorder %s56, 0
      %p166 = por %p164, %p165
      %p167 = scmp.ne.s32.totalorder %s155, %s156
      %p168 = scmp.eq.s32.totalorder %s57, 1
      %p169 = por %p167, %p168
      %p171 = scmp.ne.s32.totalorder %s156, %s170
      %p172 = scmp.eq.s32.totalorder %s57, 0
      %p173 = por %p171, %p172
      %s175 = sadd.s32 %s174, 1
      %p178 = scmp.eq.s32.totalorder %s51, 1
      %p179 = scmp.ne.s32.totalorder %s174, %s176
      %p180 = scmp.eq.s32.totalorder %s51, 0
      %p181 = por %p179, %p180
      %p182 = scmp.ne.s32.totalorder %s174, %s176
      %p183 = scmp.eq.s32.totalorder %s56, 1
      %p184 = por %p182, %p183
      %p185 = scmp.ne.s32.totalorder %s176, %s177
      %p186 = scmp.eq.s32.totalorder %s56, 0
      %p187 = por %p185, %p186
      %p188 = scmp.ne.s32.totalorder %s176, %s177
      %p189 = scmp.eq.s32.totalorder %s57, 1
      %p190 = por %p188, %p189
      %p192 = scmp.ne.s32.totalorder %s177, %s191
      %p193 = scmp.eq.s32.totalorder %s57, 0
      %p194 = por %p192, %p193
      %s196 = sadd.s32 %s195, 1
      %p199 = scmp.eq.s32.totalorder %s51, 1
      %p200 = scmp.ne.s32.totalorder %s195, %s197
      %p201 = scmp.eq.s32.totalorder %s51, 0
      %p202 = por %p200, %p201
      %p203 = scmp.ne.s32.totalorder %s195, %s197
      %p204 = scmp.eq.s32.totalorder %s56, 1
      %p205 = por %p203, %p204
      %p206 = scmp.ne.s32.totalorder %s197, %s198
      %p207 = scmp.eq.s32.totalorder %s56, 0
      %p208 = por %p206, %p207
      %p209 = scmp.ne.s32.totalorder %s197, %s198
      %p210 = scmp.eq.s32.totalorder %s57, 1
      %p211 = por %p209, %p210
      %p213 = scmp.ne.s32.totalorder %s198, %s212
      %p214 = scmp.eq.s32.totalorder %s57, 0
      %p215 = por %p213, %p214
      %s217 = sadd.s32 %s216, 1
      %p220 = scmp.eq.s32.totalorder %s51, 1
      %p221 = scmp.ne.s32.totalorder %s216, %s218
      %p222 = scmp.eq.s32.totalorder %s51, 0
      %p223 = por %p221, %p222
      %p224 = scmp.ne.s32.totalorder %s216, %s218
      %p225 = scmp.eq.s32.totalorder %s56, 1
      %p226 = por %p224, %p225
      %p227 = scmp.ne.s32.totalorder %s218, %s219
      %p228 = scmp.eq.s32.totalorder %s56, 0
      %p229 = por %p227, %p228
      %p230 = scmp.ne.s32.totalorder %s218, %s219
      %p231 = scmp.eq.s32.totalorder %s57, 1
      %p232 = por %p230, %p231
      %p234 = scmp.ne.s32.totalorder %s219, %s233
      %p235 = scmp.eq.s32.totalorder %s57, 0
      %p236 = por %p234, %p235
      %s238 = sadd.s32 %s237, 1
      %p241 = scmp.eq.s32.totalorder %s51, 1
      %p242 = scmp.ne.s32.totalorder %s237, %s239
      %p243 = scmp.eq.s32.totalorder %s51, 0
      %p244 = por %p242, %p243
      %p245 = scmp.ne.s32.totalorder %s237, %s239
      %p246 = scmp.eq.s32.totalorder %s56, 1
      %p247 = por %p245, %p246
      %p248 = scmp.ne.s32.totalorder %s239, %s240
      %p249 = scmp.eq.s32.totalorder %s56, 0
      %p250 = por %p248, %p249
      %p251 = scmp.ne.s32.totalorder %s239, %s240
      %p252 = scmp.eq.s32.totalorder %s57, 1
      %p253 = por %p251, %p252
      %p255 = scmp.ne.s32.totalorder %s240, %s254
      %p256 = scmp.eq.s32.totalorder %s57, 0
      %p257 = por %p255, %p256
      %s259 = sadd.s32 %s258, 1
      %p262 = scmp.eq.s32.totalorder %s51, 1
      %p263 = scmp.ne.s32.totalorder %s258, %s260
      %p264 = scmp.eq.s32.totalorder %s51, 0
      %p265 = por %p263, %p264
      %p266 = scmp.ne.s32.totalorder %s258, %s260
      %p267 = scmp.eq.s32.totalorder %s56, 1
      %p268 = por %p266, %p267
      %p269 = scmp.ne.s32.totalorder %s260, %s261
      %p270 = scmp.eq.s32.totalorder %s56, 0
      %p271 = por %p269, %p270
      %p272 = scmp.ne.s32.totalorder %s260, %s261
      %p273 = scmp.eq.s32.totalorder %s57, 1
      %p274 = por %p272, %p273
      %p276 = scmp.ne.s32.totalorder %s261, %s275
      %p277 = scmp.eq.s32.totalorder %s57, 0
      %p278 = por %p276, %p277
      %s280 = sadd.s32 %s279, 1
      %p283 = scmp.eq.s32.totalorder %s51, 1
      %p284 = scmp.ne.s32.totalorder %s279, %s281
      %p285 = scmp.eq.s32.totalorder %s51, 0
      %p286 = por %p284, %p285
      %p287 = scmp.ne.s32.totalorder %s279, %s281
      %p288 = scmp.eq.s32.totalorder %s56, 1
      %p289 = por %p287, %p288
      %p290 = scmp.ne.s32.totalorder %s281, %s282
      %p291 = scmp.eq.s32.totalorder %s56, 0
      %p292 = por %p290, %p291
      %p293 = scmp.ne.s32.totalorder %s281, %s282
      %p294 = scmp.eq.s32.totalorder %s57, 1
      %p295 = por %p293, %p294
      %p297 = scmp.ne.s32.totalorder %s282, %s296
      %p298 = scmp.eq.s32.totalorder %s57, 0
      %p299 = por %p297, %p298
      %s301 = sadd.s32 %s300, 1
      %p304 = scmp.eq.s32.totalorder %s51, 1
      %p305 = scmp.ne.s32.totalorder %s300, %s302
      %p306 = scmp.eq.s32.totalorder %s51, 0
      %p307 = por %p305, %p306
      %p308 = scmp.ne.s32.totalorder %s300, %s302
      %p309 = scmp.eq.s32.totalorder %s56, 1
      %p310 = por %p308, %p309
      %p311 = scmp.ne.s32.totalorder %s302, %s303
      %p312 = scmp.eq.s32.totalorder %s56, 0
      %p313 = por %p311, %p312
      %p314 = scmp.ne.s32.totalorder %s302, %s303
      %p315 = scmp.eq.s32.totalorder %s57, 1
      %p316 = por %p314, %p315
      %p318 = scmp.ne.s32.totalorder %s303, %s317
      %p319 = scmp.eq.s32.totalorder %s57, 0
      %p320 = por %p318, %p319
      %s322 = sadd.s32 %s321, 1
      %p325 = scmp.eq.s32.totalorder %s51, 1
      %p326 = scmp.ne.s32.totalorder %s321, %s323
      %p327 = scmp.eq.s32.totalorder %s51, 0
      %p328 = por %p326, %p327
      %p329 = scmp.ne.s32.totalorder %s321, %s323
      %p330 = scmp.eq.s32.totalorder %s56, 1
      %p331 = por %p329, %p330
      %p332 = scmp.ne.s32.totalorder %s323, %s324
      %p333 = scmp.eq.s32.totalorder %s56, 0
      %p334 = por %p332, %p333
      %p335 = scmp.ne.s32.totalorder %s323, %s324
      %p336 = scmp.eq.s32.totalorder %s57, 1
      %p337 = por %p335, %p336
      %p339 = scmp.ne.s32.totalorder %s324, %s338
      %p340 = scmp.eq.s32.totalorder %s57, 0
      %p341 = por %p339, %p340
      %s343 = sadd.s32 %s342, 1
      %p346 = scmp.eq.s32.totalorder %s51, 1
      %p347 = scmp.ne.s32.totalorder %s342, %s344
      %p348 = scmp.eq.s32.totalorder %s51, 0
      %p349 = por %p347, %p348
      %p350 = scmp.ne.s32.totalorder %s342, %s344
      %p351 = scmp.eq.s32.totalorder %s56, 1
      %p352 = por %p350, %p351
      %p353 = scmp.ne.s32.totalorder %s344, %s345
      %p354 = scmp.eq.s32.totalorder %s56, 0
      %p355 = por %p353, %p354
      %p356 = scmp.ne.s32.totalorder %s344, %s345
      %p357 = scmp.eq.s32.totalorder %s57, 1
      %p358 = por %p356, %p357
      %p360 = scmp.ne.s32.totalorder %s345, %s359
      %p361 = scmp.eq.s32.totalorder %s57, 0
      %p362 = por %p360, %p361
      %s364 = sadd.s32 %s363, 1
      %p367 = scmp.eq.s32.totalorder %s51, 1
      %p368 = scmp.ne.s32.totalorder %s363, %s365
      %p369 = scmp.eq.s32.totalorder %s51, 0
      %p370 = por %p368, %p369
      %p371 = scmp.ne.s32.totalorder %s363, %s365
      %p372 = scmp.eq.s32.totalorder %s56, 1
      %p373 = por %p371, %p372
      %p374 = scmp.ne.s32.totalorder %s365, %s366
      %p375 = scmp.eq.s32.totalorder %s56, 0
      %p376 = por %p374, %p375
      %p377 = scmp.ne.s32.totalorder %s365, %s366
      %p378 = scmp.eq.s32.totalorder %s57, 1
      %p379 = por %p377, %p378
      %p381 = scmp.ne.s32.totalorder %s366, %s380
      %p382 = scmp.eq.s32.totalorder %s57, 0
      %p383 = por %p381, %p382
      %s385 = sadd.s32 %s384, 1
      %p388 = scmp.eq.s32.totalorder %s51, 1
      %p389 = scmp.ne.s32.totalorder %s384, %s386
      %p390 = scmp.eq.s32.totalorder %s51, 0
      %p391 = por %p389, %p390
      %p392 = scmp.ne.s32.totalorder %s384, %s386
      %p393 = scmp.eq.s32.totalorder %s56, 1
      %p394 = por %p392, %p393
      %p395 = scmp.ne.s32.totalorder %s386, %s387
      %p396 = scmp.eq.s32.totalorder %s56, 0
      %p397 = por %p395, %p396
      %p398 = scmp.ne.s32.totalorder %s386, %s387
      %p399 = scmp.eq.s32.totalorder %s57, 1
      %p400 = por %p398, %p399
      %p402 = scmp.ne.s32.totalorder %s387, %s401
      %p403 = scmp.eq.s32.totalorder %s57, 0
      %p404 = por %p402, %p403
      %s406 = sadd.s32 %s405, 1
      %p409 = scmp.eq.s32.totalorder %s51, 1
      %p410 = scmp.ne.s32.totalorder %s405, %s407
      %p411 = scmp.eq.s32.totalorder %s51, 0
      %p412 = por %p410, %p411
      %p413 = scmp.ne.s32.totalorder %s405, %s407
      %p414 = scmp.eq.s32.totalorder %s56, 1
      %p415 = por %p413, %p414
      %p416 = scmp.ne.s32.totalorder %s407, %s408
      %p417 = scmp.eq.s32.totalorder %s56, 0
      %p418 = por %p416, %p417
      %p419 = scmp.ne.s32.totalorder %s407, %s408
      %p420 = scmp.eq.s32.totalorder %s57, 1
      %p421 = por %p419, %p420
      %p423 = scmp.ne.s32.totalorder %s408, %s422
      %p424 = scmp.eq.s32.totalorder %s57, 0
      %p425 = por %p423, %p424
      %s427 = sadd.s32 %s426, 1
      %p430 = scmp.eq.s32.totalorder %s51, 1
      %p431 = scmp.ne.s32.totalorder %s426, %s428
      %p432 = scmp.eq.s32.totalorder %s51, 0
      %p433 = por %p431, %p432
      %p434 = scmp.ne.s32.totalorder %s426, %s428
      %p435 = scmp.eq.s32.totalorder %s56, 1
      %p436 = por %p434, %p435
      %p437 = scmp.ne.s32.totalorder %s428, %s429
      %p438 = scmp.eq.s32.totalorder %s56, 0
      %p439 = por %p437, %p438
      %p440 = scmp.ne.s32.totalorder %s428, %s429
      %p441 = scmp.eq.s32.totalorder %s57, 1
      %p442 = por %p440, %p441
      %p444 = scmp.ne.s32.totalorder %s429, %s443
      %p445 = scmp.eq.s32.totalorder %s57, 0
      %p446 = por %p444, %p445
      %s448 = sadd.s32 %s447, 1
      %p451 = scmp.eq.s32.totalorder %s51, 1
      %p452 = scmp.ne.s32.totalorder %s447, %s449
      %p453 = scmp.eq.s32.totalorder %s51, 0
      %p454 = por %p452, %p453
      %p455 = scmp.ne.s32.totalorder %s447, %s449
      %p456 = scmp.eq.s32.totalorder %s56, 1
      %p457 = por %p455, %p456
      %p458 = scmp.ne.s32.totalorder %s449, %s450
      %p459 = scmp.eq.s32.totalorder %s56, 0
      %p460 = por %p458, %p459
      %p461 = scmp.ne.s32.totalorder %s449, %s450
      %p462 = scmp.eq.s32.totalorder %s57, 1
      %p463 = por %p461, %p462
      %p465 = scmp.ne.s32.totalorder %s450, %s464
      %p466 = scmp.eq.s32.totalorder %s57, 0
      %p467 = por %p465, %p466
      %s469 = sadd.s32 %s468, 1
      %p472 = scmp.eq.s32.totalorder %s51, 1
      %p473 = scmp.ne.s32.totalorder %s468, %s470
      %p474 = scmp.eq.s32.totalorder %s51, 0
      %p475 = por %p473, %p474
      %p476 = scmp.ne.s32.totalorder %s468, %s470
      %p477 = scmp.eq.s32.totalorder %s56, 1
      %p478 = por %p476, %p477
      %p479 = scmp.ne.s32.totalorder %s470, %s471
      %p480 = scmp.eq.s32.totalorder %s56, 0
      %p481 = por %p479, %p480
      %p482 = scmp.ne.s32.totalorder %s470, %s471
      %p483 = scmp.eq.s32.totalorder %s57, 1
      %p484 = por %p482, %p483
      %p486 = scmp.ne.s32.totalorder %s471, %s485
      %p487 = scmp.eq.s32.totalorder %s57, 0
      %p488 = por %p486, %p487
      %s490 = sadd.s32 %s489, 1
      %p493 = scmp.eq.s32.totalorder %s51, 1
      %p494 = scmp.ne.s32.totalorder %s489, %s491
      %p495 = scmp.eq.s32.totalorder %s51, 0
      %p496 = por %p494, %p495
      %p497 = scmp.ne.s32.totalorder %s489, %s491
      %p498 = scmp.eq.s32.totalorder %s56, 1
      %p499 = por %p497, %p498
      %p500 = scmp.ne.s32.totalorder %s491, %s492
      %p501 = scmp.eq.s32.totalorder %s56, 0
      %p502 = por %p500, %p501
      %p503 = scmp.ne.s32.totalorder %s491, %s492
      %p504 = scmp.eq.s32.totalorder %s57, 1
      %p505 = por %p503, %p504
      %p507 = scmp.ne.s32.totalorder %s492, %s506
      %p508 = scmp.eq.s32.totalorder %s57, 0
      %p509 = por %p507, %p508
      %s511 = sadd.s32 %s510, 1
      %p514 = scmp.eq.s32.totalorder %s51, 1
      %p515 = scmp.ne.s32.totalorder %s510, %s512
      %p516 = scmp.eq.s32.totalorder %s51, 0
      %p517 = por %p515, %p516
      %p518 = scmp.ne.s32.totalorder %s510, %s512
      %p519 = scmp.eq.s32.totalorder %s56, 1
      %p520 = por %p518, %p519
      %p521 = scmp.ne.s32.totalorder %s512, %s513
      %p522 = scmp.eq.s32.totalorder %s56, 0
      %p523 = por %p521, %p522
      %p524 = scmp.ne.s32.totalorder %s512, %s513
      %p525 = scmp.eq.s32.totalorder %s57, 1
      %p526 = por %p524, %p525
      %p528 = scmp.ne.s32.totalorder %s513, %s527
      %p529 = scmp.eq.s32.totalorder %s57, 0
      %p530 = por %p528, %p529
      %s532 = sadd.s32 %s531, 1
      %p535 = scmp.eq.s32.totalorder %s51, 1
      %p536 = scmp.ne.s32.totalorder %s531, %s533
      %p537 = scmp.eq.s32.totalorder %s51, 0
      %p538 = por %p536, %p537
      %p539 = scmp.ne.s32.totalorder %s531, %s533
      %p540 = scmp.eq.s32.totalorder %s56, 1
      %p541 = por %p539, %p540
      %p542 = scmp.ne.s32.totalorder %s533, %s534
      %p543 = scmp.eq.s32.totalorder %s56, 0
      %p544 = por %p542, %p543
      %p545 = scmp.ne.s32.totalorder %s533, %s534
      %p546 = scmp.eq.s32.totalorder %s57, 1
      %p547 = por %p545, %p546
      %p549 = scmp.ne.s32.totalorder %s534, %s548
      %p550 = scmp.eq.s32.totalorder %s57, 0
      %p551 = por %p549, %p550
      %s553 = sadd.s32 %s552, 1
      %p556 = scmp.eq.s32.totalorder %s51, 1
      %p557 = scmp.ne.s32.totalorder %s552, %s554
      %p558 = scmp.eq.s32.totalorder %s51, 0
      %p559 = por %p557, %p558
      %p560 = scmp.ne.s32.totalorder %s552, %s554
      %p561 = scmp.eq.s32.totalorder %s56, 1
      %p562 = por %p560, %p561
      %p563 = scmp.ne.s32.totalorder %s554, %s555
      %p564 = scmp.eq.s32.totalorder %s56, 0
      %p565 = por %p563, %p564
      %p566 = scmp.ne.s32.totalorder %s554, %s555
      %p567 = scmp.eq.s32.totalorder %s57, 1
      %p568 = por %p566, %p567
      %p570 = scmp.ne.s32.totalorder %s555, %s569
      %p571 = scmp.eq.s32.totalorder %s57, 0
      %p572 = por %p570, %p571
      %s574 = sadd.s32 %s573, 1
      %p577 = scmp.eq.s32.totalorder %s51, 1
      %p578 = scmp.ne.s32.totalorder %s573, %s575
      %p579 = scmp.eq.s32.totalorder %s51, 0
      %p580 = por %p578, %p579
      %p581 = scmp.ne.s32.totalorder %s573, %s575
      %p582 = scmp.eq.s32.totalorder %s56, 1
      %p583 = por %p581, %p582
      %p584 = scmp.ne.s32.totalorder %s575, %s576
      %p585 = scmp.eq.s32.totalorder %s56, 0
      %p586 = por %p584, %p585
      %p587 = scmp.ne.s32.totalorder %s575, %s576
      %p588 = scmp.eq.s32.totalorder %s57, 1
      %p589 = por %p587, %p588
      %p591 = scmp.ne.s32.totalorder %s576, %s590
      %p592 = scmp.eq.s32.totalorder %s57, 0
      %p593 = por %p591, %p592
      %s594 = ssub.s32 %s51, %s58
      %p595 = scmp.eq.s32.totalorder %s594, 0
      %s597 = sadd.s32 %s596, 1
      %s598 = scalar_select %p595, %s596, %s597
      %p601 = pneg %p595
      %p602 = scmp.eq.s32.totalorder %s51, 1
      %p603 = por %p601, %p602
      %p604 = scmp.ne.s32.totalorder %s596, %s599
      %p605 = scmp.eq.s32.totalorder %s51, 0
      %p606 = por %p604, %p605
      %p607 = scmp.ne.s32.totalorder %s596, %s599
      %p608 = scmp.eq.s32.totalorder %s56, 1
      %p609 = por %p607, %p608
      %p610 = scmp.ne.s32.totalorder %s599, %s600
      %p611 = scmp.eq.s32.totalorder %s56, 0
      %p612 = por %p610, %p611
      %p613 = scmp.ne.s32.totalorder %s599, %s600
      %p614 = scmp.eq.s32.totalorder %s57, 1
      %p615 = por %p613, %p614
      %p617 = scmp.ne.s32.totalorder %s600, %s616
      %p618 = scmp.eq.s32.totalorder %s57, 0
      %p619 = por %p617, %p618
      %p620 = scmp.le.s32.totalorder 1, %s51
      %p621 = scmp.lt.s32.totalorder %s51, 3
      %p622 = pnand %p620, %p621
      %p623 = pneg %p622
      // Predicated region
      $region9: #{tpu_custom_call.1} parent=5 // pred_check
        _
      $region10: #{tpu_custom_call.1} parent=5 // pred_check_branch
        %625 = sbr.rel (%p622) target = $region12
      $region11: #{tpu_custom_call.1} parent=5 // pred_region
        %s626 = ssub.s32 %s51, 1
        // Predicated region
        $region13: #{tpu_custom_call.1} parent=11 // pred_check
          %p627 = pneg %p124
        $region14: #{tpu_custom_call.1} parent=11 // pred_check_branch
          %629 = sbr.rel (%p627) target = $region16
        $region15: #{tpu_custom_call.1} parent=11 // pred_region
          _
        $region16: #{tpu_custom_call.1} parent=11 // pred_fallthru
          _
        // Predicated region
        $region17: #{tpu_custom_call.1} parent=11 // pred_check
          %p630 = pneg %p145
        $region18: #{tpu_custom_call.1} parent=11 // pred_check_branch
          %632 = sbr.rel (%p630) target = $region20
        $region19: #{tpu_custom_call.1} parent=11 // pred_region
          _
        $region20: #{tpu_custom_call.1} parent=11 // pred_fallthru
          _
        // Predicated region
        $region21: #{tpu_custom_call.1} parent=11 // pred_check
          %p633 = pneg %p166
        $region22: #{tpu_custom_call.1} parent=11 // pred_check_branch
          %635 = sbr.rel (%p633) target = $region24
        $region23: #{tpu_custom_call.1} parent=11 // pred_region
          _
        $region24: #{tpu_custom_call.1} parent=11 // pred_fallthru
          _
        // Predicated region
        $region25: #{tpu_custom_call.1} parent=11 // pred_check
          %p636 = pneg %p187
        $region26: #{tpu_custom_call.1} parent=11 // pred_check_branch
          %638 = sbr.rel (%p636) target = $region28
        $region27: #{tpu_custom_call.1} parent=11 // pred_region
          _
        $region28: #{tpu_custom_call.1} parent=11 // pred_fallthru
          _
        // Predicated region
        $region29: #{tpu_custom_call.1} parent=11 // pred_check
          %p639 = pneg %p208
        $region30: #{tpu_custom_call.1} parent=11 // pred_check_branch
          %641 = sbr.rel (%p639) target = $region32
        $region31: #{tpu_custom_call.1} parent=11 // pred_region
          _
        $region32: #{tpu_custom_call.1} parent=11 // pred_fallthru
          _
        // Predicated region
        $region33: #{tpu_custom_call.1} parent=11 // pred_check
          %p642 = pneg %p229
        $region34: #{tpu_custom_call.1} parent=11 // pred_check_branch
          %644 = sbr.rel (%p642) target = $region36
        $region35: #{tpu_custom_call.1} parent=11 // pred_region
          _
        $region36: #{tpu_custom_call.1} parent=11 // pred_fallthru
          _
        // Predicated region
        $region37: #{tpu_custom_call.1} parent=11 // pred_check
          %p645 = pneg %p250
        $region38: #{tpu_custom_call.1} parent=11 // pred_check_branch
          %647 = sbr.rel (%p645) target = $region40
        $region39: #{tpu_custom_call.1} parent=11 // pred_region
          %s649 = ssub.s32 256, 256
          %650 = vsyncadd [#allocation7], %s649
          %s651 = sshll.u32 [#allocation6], 4
          %s652 = int_to_ptr.vmem [resolvable:$true] %s651
          %657 = dma.hbm_to_vmem [thread:$0]  %s10, 256, %s652, [#allocation7], 64, 64, 4
        $region40: #{tpu_custom_call.1} parent=11 // pred_fallthru
          _
        // Predicated region
        $region41: #{tpu_custom_call.1} parent=11 // pred_check
          %p658 = pneg %p271
        $region42: #{tpu_custom_call.1} parent=11 // pred_check_branch
          %660 = sbr.rel (%p658) target = $region44
        $region43: #{tpu_custom_call.1} parent=11 // pred_region
          %s662 = ssub.s32 256, 256
          %663 = vsyncadd [#allocation10], %s662
          %s664 = sshll.u32 [#allocation9], 4
          %s665 = int_to_ptr.vmem [resolvable:$true] %s664
          %670 = dma.hbm_to_vmem [thread:$0]  %s11, 256, %s665, [#allocation10], 64, 64, 4
        $region44: #{tpu_custom_call.1} parent=11 // pred_fallthru
          _
        // Predicated region
        $region45: #{tpu_custom_call.1} parent=11 // pred_check
          %p671 = pneg %p292
        $region46: #{tpu_custom_call.1} parent=11 // pred_check_branch
          %673 = sbr.rel (%p671) target = $region48
        $region47: #{tpu_custom_call.1} parent=11 // pred_region
          _
        $region48: #{tpu_custom_call.1} parent=11 // pred_fallthru
          _
        // Predicated region
        $region49: #{tpu_custom_call.1} parent=11 // pred_check
          %p674 = pneg %p313
        $region50: #{tpu_custom_call.1} parent=11 // pred_check_branch
          %676 = sbr.rel (%p674) target = $region52
        $region51: #{tpu_custom_call.1} parent=11 // pred_region
          %s678 = ssub.s32 256, 256
          %679 = vsyncadd [#allocation10], %s678
          %s680 = sshll.u32 [#allocation11], 4
          %s681 = int_to_ptr.vmem [resolvable:$true] %s680
          %686 = dma.hbm_to_vmem [thread:$0]  %s13, 256, %s681, [#allocation10], 64, 64, 4
        $region52: #{tpu_custom_call.1} parent=11 // pred_fallthru
          _
        // Predicated region
        $region53: #{tpu_custom_call.1} parent=11 // pred_check
          %p687 = pneg %p334
        $region54: #{tpu_custom_call.1} parent=11 // pred_check_branch
          %689 = sbr.rel (%p687) target = $region56
        $region55: #{tpu_custom_call.1} parent=11 // pred_region
          %s691 = ssub.s32 256, 256
          %692 = vsyncadd [#allocation13], %s691
          %s693 = sshll.u32 [#allocation12], 4
          %s694 = int_to_ptr.vmem [resolvable:$true] %s693
          %699 = dma.hbm_to_vmem [thread:$0]  %s14, 256, %s694, [#allocation13], 64, 64, 4
        $region56: #{tpu_custom_call.1} parent=11 // pred_fallthru
          _
        // Predicated region
        $region57: #{tpu_custom_call.1} parent=11 // pred_check
          %p700 = pneg %p355
        $region58: #{tpu_custom_call.1} parent=11 // pred_check_branch
          %702 = sbr.rel (%p700) target = $region60
        $region59: #{tpu_custom_call.1} parent=11 // pred_region
          _
        $region60: #{tpu_custom_call.1} parent=11 // pred_fallthru
          _
        // Predicated region
        $region61: #{tpu_custom_call.1} parent=11 // pred_check
          %p703 = pneg %p376
        $region62: #{tpu_custom_call.1} parent=11 // pred_check_branch
          %705 = sbr.rel (%p703) target = $region64
        $region63: #{tpu_custom_call.1} parent=11 // pred_region
          %s707 = ssub.s32 256, 256
          %708 = vsyncadd [#allocation13], %s707
          %s709 = sshll.u32 [#allocation14], 4
          %s710 = int_to_ptr.vmem [resolvable:$true] %s709
          %715 = dma.hbm_to_vmem [thread:$0]  %s16, 256, %s710, [#allocation13], 64, 64, 4
        $region64: #{tpu_custom_call.1} parent=11 // pred_fallthru
          _
        // Predicated region
        $region65: #{tpu_custom_call.1} parent=11 // pred_check
          %p716 = pneg %p397
        $region66: #{tpu_custom_call.1} parent=11 // pred_check_branch
          %718 = sbr.rel (%p716) target = $region68
        $region67: #{tpu_custom_call.1} parent=11 // pred_region
          %s720 = ssub.s32 256, 256
          %721 = vsyncadd [#allocation16], %s720
          %s722 = sshll.u32 [#allocation15], 4
          %s723 = int_to_ptr.vmem [resolvable:$true] %s722
          %728 = dma.hbm_to_vmem [thread:$0]  %s17, 256, %s723, [#allocation16], 64, 64, 4
        $region68: #{tpu_custom_call.1} parent=11 // pred_fallthru
          _
        // Predicated region
        $region69: #{tpu_custom_call.1} parent=11 // pred_check
          %p729 = pneg %p418
        $region70: #{tpu_custom_call.1} parent=11 // pred_check_branch
          %731 = sbr.rel (%p729) target = $region72
        $region71: #{tpu_custom_call.1} parent=11 // pred_region
          %s733 = ssub.s32 256, 256
          %734 = vsyncadd [#allocation16], %s733
          %s735 = sshll.u32 [#allocation17], 4
          %s736 = int_to_ptr.vmem [resolvable:$true] %s735
          %741 = dma.hbm_to_vmem [thread:$0]  %s18, 256, %s736, [#allocation16], 64, 64, 4
        $region72: #{tpu_custom_call.1} parent=11 // pred_fallthru
          _
        // Predicated region
        $region73: #{tpu_custom_call.1} parent=11 // pred_check
          %p742 = pneg %p439
        $region74: #{tpu_custom_call.1} parent=11 // pred_check_branch
          %744 = sbr.rel (%p742) target = $region76
        $region75: #{tpu_custom_call.1} parent=11 // pred_region
          %s746 = ssub.s32 256, 256
          %747 = vsyncadd [#allocation19], %s746
          %s748 = sshll.u32 [#allocation18], 4
          %s749 = int_to_ptr.vmem [resolvable:$true] %s748
          %754 = dma.hbm_to_vmem [thread:$0]  %s19, 256, %s749, [#allocation19], 64, 64, 4
        $region76: #{tpu_custom_call.1} parent=11 // pred_fallthru
          _
        // Predicated region
        $region77: #{tpu_custom_call.1} parent=11 // pred_check
          %p755 = pneg %p460
        $region78: #{tpu_custom_call.1} parent=11 // pred_check_branch
          %757 = sbr.rel (%p755) target = $region80
        $region79: #{tpu_custom_call.1} parent=11 // pred_region
          %s759 = ssub.s32 256, 256
          %760 = vsyncadd [#allocation19], %s759
          %s761 = sshll.u32 [#allocation20], 4
          %s762 = int_to_ptr.vmem [resolvable:$true] %s761
          %767 = dma.hbm_to_vmem [thread:$0]  %s20, 256, %s762, [#allocation19], 64, 64, 4
        $region80: #{tpu_custom_call.1} parent=11 // pred_fallthru
          _
        // Predicated region
        $region81: #{tpu_custom_call.1} parent=11 // pred_check
          %p768 = pneg %p481
        $region82: #{tpu_custom_call.1} parent=11 // pred_check_branch
          %770 = sbr.rel (%p768) target = $region84
        $region83: #{tpu_custom_call.1} parent=11 // pred_region
          %s772 = ssub.s32 256, 256
          %773 = vsyncadd [#allocation22], %s772
          %s774 = sshll.u32 [#allocation21], 4
          %s775 = int_to_ptr.vmem [resolvable:$true] %s774
          %780 = dma.hbm_to_vmem [thread:$0]  %s21, 256, %s775, [#allocation22], 64, 64, 4
        $region84: #{tpu_custom_call.1} parent=11 // pred_fallthru
          _
        // Predicated region
        $region85: #{tpu_custom_call.1} parent=11 // pred_check
          %p781 = pneg %p502
        $region86: #{tpu_custom_call.1} parent=11 // pred_check_branch
          %783 = sbr.rel (%p781) target = $region88
        $region87: #{tpu_custom_call.1} parent=11 // pred_region
          %s785 = ssub.s32 256, 256
          %786 = vsyncadd [#allocation22], %s785
          %s787 = sshll.u32 [#allocation23], 4
          %s788 = int_to_ptr.vmem [resolvable:$true] %s787
          %793 = dma.hbm_to_vmem [thread:$0]  %s22, 256, %s788, [#allocation22], 64, 64, 4
        $region88: #{tpu_custom_call.1} parent=11 // pred_fallthru
          _
        // Predicated region
        $region89: #{tpu_custom_call.1} parent=11 // pred_check
          %p794 = pneg %p523
        $region90: #{tpu_custom_call.1} parent=11 // pred_check_branch
          %796 = sbr.rel (%p794) target = $region92
        $region91: #{tpu_custom_call.1} parent=11 // pred_region
          %s798 = ssub.s32 256, 256
          %799 = vsyncadd [#allocation25], %s798
          %s800 = sshll.u32 [#allocation24], 4
          %s801 = int_to_ptr.vmem [resolvable:$true] %s800
          %806 = dma.hbm_to_vmem [thread:$0]  %s23, 256, %s801, [#allocation25], 64, 64, 4
        $region92: #{tpu_custom_call.1} parent=11 // pred_fallthru
          _
        // Predicated region
        $region93: #{tpu_custom_call.1} parent=11 // pred_check
          %p807 = pneg %p544
        $region94: #{tpu_custom_call.1} parent=11 // pred_check_branch
          %809 = sbr.rel (%p807) target = $region96
        $region95: #{tpu_custom_call.1} parent=11 // pred_region
          _
        $region96: #{tpu_custom_call.1} parent=11 // pred_fallthru
          _
        // Predicated region
        $region97: #{tpu_custom_call.1} parent=11 // pred_check
          %p810 = pneg %p565
        $region98: #{tpu_custom_call.1} parent=11 // pred_check_branch
          %812 = sbr.rel (%p810) target = $region100
        $region99: #{tpu_custom_call.1} parent=11 // pred_region
          _
        $region100: #{tpu_custom_call.1} parent=11 // pred_fallthru
          _
        // Predicated region
        $region101: #{tpu_custom_call.1} parent=11 // pred_check
          %p813 = pneg %p586
        $region102: #{tpu_custom_call.1} parent=11 // pred_check_branch
          %815 = sbr.rel (%p813) target = $region104
        $region103: #{tpu_custom_call.1} parent=11 // pred_region
          _
        $region104: #{tpu_custom_call.1} parent=11 // pred_fallthru
          _
      $region12: #{tpu_custom_call.1} parent=5 // pred_fallthru
        _
      %p816 = scmp.lt.s32.totalorder %s51, 2
      // Predicated region
      $region105: #{tpu_custom_call.1} parent=5 // pred_check
        %p817 = pneg %p816
      $region106: #{tpu_custom_call.1} parent=5 // pred_check_branch
        %819 = sbr.rel (%p817) target = $region108
      $region107: #{tpu_custom_call.1} parent=5 // pred_region
        // Predicated region
        $region109: #{tpu_custom_call.1} parent=107 // pred_check
          %p820 = pneg %p71
        $region110: #{tpu_custom_call.1} parent=107 // pred_check_branch
          %822 = sbr.rel (%p820) target = $region112
        $region111: #{tpu_custom_call.1} parent=107 // pred_region
          %p823 = scmp.lt.s32.totalorder %s51, 1
          %s824 = scalar_select %p823, %s51, 1
          %s825 = smul.addr %s824, 2
          %s826 = smul.addr %s825, 8
          %s827 = scalar_lea.vmem %s2, %s826
        $region112: #{tpu_custom_call.1} parent=107 // pred_fallthru
          _
        // Predicated region
        $region113: #{tpu_custom_call.1} parent=107 // pred_check
          %p828 = pneg %p97
        $region114: #{tpu_custom_call.1} parent=107 // pred_check_branch
          %830 = sbr.rel (%p828) target = $region116
        $region115: #{tpu_custom_call.1} parent=107 // pred_region
          %p831 = scmp.lt.s32.totalorder %s51, 1
          %s832 = scalar_select %p831, %s51, 1
          %s833 = smul.addr %s832, 2
          %s834 = smul.addr %s833, 4
          %s835 = scalar_lea.vmem %s3, %s834
        $region116: #{tpu_custom_call.1} parent=107 // pred_fallthru
          _
      $region108: #{tpu_custom_call.1} parent=5 // pred_fallthru
        _
      %p836 = scmp.le.s32.totalorder 1, %s51
      %p837 = scmp.lt.s32.totalorder %s51, 3
      %p838 = pnand %p836, %p837
      %p839 = pneg %p838
      // Predicated region
      $region117: #{tpu_custom_call.1} parent=5 // pred_check
        _
      $region118: #{tpu_custom_call.1} parent=5 // pred_check_branch
        %841 = sbr.rel (%p838) target = $region120
      $region119: #{tpu_custom_call.1} parent=5 // pred_region
        %s842 = ssub.s32 %s51, 1
        // Predicated region
        $region121: #{tpu_custom_call.1} parent=119 // pred_check
          %p843 = pneg %p250
        $region122: #{tpu_custom_call.1} parent=119 // pred_check_branch
          %845 = sbr.rel (%p843) target = $region124
        $region123: #{tpu_custom_call.1} parent=119 // pred_region
          %846 = dma.done [#allocation7], 256
        $region124: #{tpu_custom_call.1} parent=119 // pred_fallthru
          _
        // Predicated region
        $region125: #{tpu_custom_call.1} parent=119 // pred_check
          %p847 = pneg %p271
        $region126: #{tpu_custom_call.1} parent=119 // pred_check_branch
          %849 = sbr.rel (%p847) target = $region128
        $region127: #{tpu_custom_call.1} parent=119 // pred_region
          %850 = dma.done [#allocation10], 256
        $region128: #{tpu_custom_call.1} parent=119 // pred_fallthru
          _
        // Predicated region
        $region129: #{tpu_custom_call.1} parent=119 // pred_check
          %p851 = pneg %p313
        $region130: #{tpu_custom_call.1} parent=119 // pred_check_branch
          %853 = sbr.rel (%p851) target = $region132
        $region131: #{tpu_custom_call.1} parent=119 // pred_region
          %854 = dma.done [#allocation10], 256
        $region132: #{tpu_custom_call.1} parent=119 // pred_fallthru
          _
        // Predicated region
        $region133: #{tpu_custom_call.1} parent=119 // pred_check
          %p855 = pneg %p334
        $region134: #{tpu_custom_call.1} parent=119 // pred_check_branch
          %857 = sbr.rel (%p855) target = $region136
        $region135: #{tpu_custom_call.1} parent=119 // pred_region
          %858 = dma.done [#allocation13], 256
        $region136: #{tpu_custom_call.1} parent=119 // pred_fallthru
          _
        // Predicated region
        $region137: #{tpu_custom_call.1} parent=119 // pred_check
          %p859 = pneg %p376
        $region138: #{tpu_custom_call.1} parent=119 // pred_check_branch
          %861 = sbr.rel (%p859) target = $region140
        $region139: #{tpu_custom_call.1} parent=119 // pred_region
          %862 = dma.done [#allocation13], 256
        $region140: #{tpu_custom_call.1} parent=119 // pred_fallthru
          _
        // Predicated region
        $region141: #{tpu_custom_call.1} parent=119 // pred_check
          %p863 = pneg %p397
        $region142: #{tpu_custom_call.1} parent=119 // pred_check_branch
          %865 = sbr.rel (%p863) target = $region144
        $region143: #{tpu_custom_call.1} parent=119 // pred_region
          %866 = dma.done [#allocation16], 256
        $region144: #{tpu_custom_call.1} parent=119 // pred_fallthru
          _
        // Predicated region
        $region145: #{tpu_custom_call.1} parent=119 // pred_check
          %p867 = pneg %p418
        $region146: #{tpu_custom_call.1} parent=119 // pred_check_branch
          %869 = sbr.rel (%p867) target = $region148
        $region147: #{tpu_custom_call.1} parent=119 // pred_region
          %870 = dma.done [#allocation16], 256
        $region148: #{tpu_custom_call.1} parent=119 // pred_fallthru
          _
        // Predicated region
        $region149: #{tpu_custom_call.1} parent=119 // pred_check
          %p871 = pneg %p439
        $region150: #{tpu_custom_call.1} parent=119 // pred_check_branch
          %873 = sbr.rel (%p871) target = $region152
        $region151: #{tpu_custom_call.1} parent=119 // pred_region
          %874 = dma.done [#allocation19], 256
        $region152: #{tpu_custom_call.1} parent=119 // pred_fallthru
          _
        // Predicated region
        $region153: #{tpu_custom_call.1} parent=119 // pred_check
          %p875 = pneg %p460
        $region154: #{tpu_custom_call.1} parent=119 // pred_check_branch
          %877 = sbr.rel (%p875) target = $region156
        $region155: #{tpu_custom_call.1} parent=119 // pred_region
          %878 = dma.done [#allocation19], 256
        $region156: #{tpu_custom_call.1} parent=119 // pred_fallthru
          _
        // Predicated region
        $region157: #{tpu_custom_call.1} parent=119 // pred_check
          %p879 = pneg %p481
        $region158: #{tpu_custom_call.1} parent=119 // pred_check_branch
          %881 = sbr.rel (%p879) target = $region160
        $region159: #{tpu_custom_call.1} parent=119 // pred_region
          %882 = dma.done [#allocation22], 256
        $region160: #{tpu_custom_call.1} parent=119 // pred_fallthru
          _
        // Predicated region
        $region161: #{tpu_custom_call.1} parent=119 // pred_check
          %p883 = pneg %p502
        $region162: #{tpu_custom_call.1} parent=119 // pred_check_branch
          %885 = sbr.rel (%p883) target = $region164
        $region163: #{tpu_custom_call.1} parent=119 // pred_region
          %886 = dma.done [#allocation22], 256
        $region164: #{tpu_custom_call.1} parent=119 // pred_fallthru
          _
        // Predicated region
        $region165: #{tpu_custom_call.1} parent=119 // pred_check
          %p887 = pneg %p523
        $region166: #{tpu_custom_call.1} parent=119 // pred_check_branch
          %889 = sbr.rel (%p887) target = $region168
        $region167: #{tpu_custom_call.1} parent=119 // pred_region
          %890 = dma.done [#allocation25], 256
        $region168: #{tpu_custom_call.1} parent=119 // pred_fallthru
          _
        %p891 = scmp.lt.s32.totalorder %s56, 1
        %s892 = scalar_select %p891, %s56, 1
        %s893 = smul.addr %s892, 2
        %s894 = smul.addr %s893, 8
        %s895 = scalar_lea.vmem %s2, %s894
        %p896 = pneg %p77
        %p897 = pneg %p74
        %p898 = scmp.lt.s32.totalorder %s56, 1
        %s899 = scalar_select %p898, %s56, 1
        %s900 = smul.addr %s899, 2
        %s901 = smul.addr %s900, 4
        %s902 = scalar_lea.vmem %s3, %s901
        %p903 = pneg %p103
        %p904 = pneg %p100
        %p905 = pneg %p124
        %p906 = pneg %p121
        %p907 = pneg %p145
        %p908 = pneg %p142
        %p909 = pneg %p166
        %p910 = pneg %p163
        %p911 = pneg %p187
        %p912 = pneg %p184
        %p913 = pneg %p208
        %p914 = pneg %p205
        %p915 = pneg %p229
        %p916 = pneg %p226
        %p917 = pneg %p250
        %p918 = pneg %p247
        %p919 = pneg %p271
        %p920 = pneg %p268
        %p921 = pneg %p292
        %p922 = pneg %p289
        %p923 = pneg %p313
        %p924 = pneg %p310
        %p925 = pneg %p334
        %p926 = pneg %p331
        %p927 = pneg %p355
        %p928 = pneg %p352
        %p929 = pneg %p376
        %p930 = pneg %p373
        %p931 = pneg %p397
        %p932 = pneg %p394
        %p933 = pneg %p418
        %p934 = pneg %p415
        %p935 = pneg %p439
        %p936 = pneg %p436
        %p937 = pneg %p460
        %p938 = pneg %p457
        %p939 = pneg %p481
        %p940 = pneg %p478
        %p941 = pneg %p502
        %p942 = pneg %p499
        %p943 = pneg %p523
        %p944 = pneg %p520
        %p945 = pneg %p544
        %p946 = pneg %p541
        %p947 = pneg %p565
        %p948 = pneg %p562
        %p949 = pneg %p586
        %p950 = pneg %p583
        %p951 = pneg %p612
        %p952 = pneg %p609
        %s953 = sand.u32 %s599, 1
        %s954 = scalar_lea.sflag [#allocation8], %s953
        %s955 = sand.u32 %s599, 1
        %s956 = smul.addr %s955, 8
        %s957 = scalar_lea.vmem [#allocation26], %s956
        %p958 = scmp.lt.s32.totalorder %s56, 1
        %s959 = scalar_select %p958, %s56, 1
        %s960 = smul.addr %s959, 2
        %s961 = smul.addr %s960, 8
        %s962 = scalar_lea.vmem %s2, %s961
        %p963 = scmp.lt.s32.totalorder %s56, 1
        %s964 = scalar_select %p963, %s56, 1
        %s965 = smul.addr %s964, 2
        %s966 = smul.addr %s965, 4
        %s967 = scalar_lea.vmem %s3, %s966
        %s969 = sld [smem:[#allocation4 + %s56]]
        %s970 = sld [smem:[#allocation5 + %s56]]
        %v971 = vld [vmem:[%s962] sm:$0xff]
        %v972 = vld [vmem:[%s962 + $0x8] sm:$0xff]
        %v973 = vld [vmem:[%s967] sm:$0xf]
        %v974 = vld [vmem:[%s967 + $0x4] sm:$0xf]
        %v975 = vld [vmem:[%s24] sm:$0x1]
        %v976 = vpack.c.bf16 %v972, %v971
        %v977 = vld [vmem:[%s4] sm:$0x3]
        %v980 = vunpack.c.l.b16 %v973
        %v981 = vunpack.c.l.b16 %v974
        %v982 = vpack.c.b16 %v981, %v980
        %vm983 = vcmask 130048
        %v985 = vsel %vm983, %v982, 0
        %987 = vmatprep.subr.bf16.mxu0 0
        %988 = vmatpush1.bf16.msra.mxu0 %v976
        %989 = vmatprep.subr.bf16.mxu0 0
        %990 = vmatpush1.bf16.msra.mxu0 0
        %991 = vmatprep.subr.bf16.mxu0 0
        %992 = vmatpush1.bf16.msra.mxu0 0
        %993 = vmatprep.subr.bf16.mxu0 0
        %994 = vmatpush1.bf16.msra.mxu0 0
        %995 = vmatprep.subr.bf16.mxu0 0
        %996 = vmatpush1.bf16.msra.mxu0 0
        %997 = vmatprep.subr.bf16.mxu0 0
        %998 = vmatpush1.bf16.msra.mxu0 0
        %999 = vmatprep.subr.bf16.mxu0 0
        %1000 = vmatpush1.bf16.msra.mxu0 0
        %1001 = vmatprep.subr.bf16.mxu0 0
        %1002 = vmatpush1.bf16.msra.mxu0 0
        %1003 = vmatprep.subr.bf16.mxu0 0
        %1004 = vmatpush1.bf16.msra.mxu0 0
        %1005 = vmatprep.subr.bf16.mxu0 0
        %1006 = vmatpush1.bf16.msra.mxu0 0
        %1007 = vmatprep.subr.bf16.mxu0 0
        %1008 = vmatpush1.bf16.msra.mxu0 0
        %1009 = vmatprep.subr.bf16.mxu0 0
        %1010 = vmatpush1.bf16.msra.mxu0 0
        %1011 = vmatprep.subr.bf16.mxu0 0
        %1012 = vmatpush1.bf16.msra.mxu0 0
        %1013 = vmatprep.subr.bf16.mxu0 0
        %1014 = vmatpush1.bf16.msra.mxu0 0
        %1015 = vmatprep.subr.bf16.mxu0 0
        %1016 = vmatpush1.bf16.msra.mxu0 0
        %1017 = vmatprep.subr.bf16.mxu0 0
        %1018 = vmatpush1.bf16.msra.mxu0 0
        %1019 = vmatprep.mubr.bf16.mxu0 0
        %1020 = vmatmul.mubr.bf16.gmra.mrb[0].mxu0 %v985
        %v1021 = vpop.f32.mrb[0].mxu0
        %v1022 = vadd.f32 0.0, %v1021
        %v1023 = vpop.f32.mrb[0].mxu0
        %v1024 = vpop.f32.mrb[0].mxu0
        %v1025 = vadd.f32 0.0, %v1024
        %v1026 = vpop.f32.mrb[0].mxu0
        %1027 = vdwg.mxu0
        %v1028 = vpack.c.bf16 %v1025, %v1022
        %v1029 = vld [vmem:[%s5] sm:$0x3]
        %vm1030 = vcmask 31744
        %v1032 = vsel %vm1030, %v1028, 0
        %vm1034 = vcmask 1041408
        %v1036 = vsel %vm1034, %v1029, 0
        %1038 = vmatprep.subr.bf16.mxu0 0
        %1039 = vmatpush1.bf16.msra.mxu0 %v1036
        %1040 = vmatprep.subr.bf16.mxu0 0
        %1041 = vmatpush1.bf16.msra.mxu0 0
        %1042 = vmatprep.subr.bf16.mxu0 0
        %1043 = vmatpush1.bf16.msra.mxu0 0
        %1044 = vmatprep.subr.bf16.mxu0 0
        %1045 = vmatpush1.bf16.msra.mxu0 0
        %1046 = vmatprep.subr.bf16.mxu0 0
        %1047 = vmatpush1.bf16.msra.mxu0 0
        %1048 = vmatprep.subr.bf16.mxu0 0
        %1049 = vmatpush1.bf16.msra.mxu0 0
        %1050 = vmatprep.subr.bf16.mxu0 0
        %1051 = vmatpush1.bf16.msra.mxu0 0
        %1052 = vmatprep.subr.bf16.mxu0 0
        %1053 = vmatpush1.bf16.msra.mxu0 0
        %1054 = vmatprep.subr.bf16.mxu0 0
        %1055 = vmatpush1.bf16.msra.mxu0 0
        %1056 = vmatprep.subr.bf16.mxu0 0
        %1057 = vmatpush1.bf16.msra.mxu0 0
        %1058 = vmatprep.subr.bf16.mxu0 0
        %1059 = vmatpush1.bf16.msra.mxu0 0
        %1060 = vmatprep.subr.bf16.mxu0 0
        %1061 = vmatpush1.bf16.msra.mxu0 0
        %1062 = vmatprep.subr.bf16.mxu0 0
        %1063 = vmatpush1.bf16.msra.mxu0 0
        %1064 = vmatprep.subr.bf16.mxu0 0
        %1065 = vmatpush1.bf16.msra.mxu0 0
        %1066 = vmatprep.subr.bf16.mxu0 0
        %1067 = vmatpush1.bf16.msra.mxu0 0
        %1068 = vmatprep.subr.bf16.mxu0 0
        %1069 = vmatpush1.bf16.msra.mxu0 0
        %1070 = vmatprep.mubr.bf16.mxu0 0
        %1071 = vmatmul.mubr.bf16.gmra.mrb[0].mxu0 %v1032
        %v1072 = vpop.f32.mrb[0].mxu0
        %v1073 = vadd.f32 0.0, %v1072
        %v1074 = vpop.f32.mrb[0].mxu0
        %v1075 = vpop.f32.mrb[0].mxu0
        %v1076 = vadd.f32 0.0, %v1075
        %v1077 = vpop.f32.mrb[0].mxu0
        %1078 = vdwg.mxu0
        %v1080 = vsel %vm1030, %v976, 0
        %v1083 = vsel %vm1034, %v977, 0
        %1085 = vmatprep.subr.bf16.mxu0 0
        %1086 = vmatpush1.bf16.msra.mxu0 %v1083
        %1087 = vmatprep.subr.bf16.mxu0 0
        %1088 = vmatpush1.bf16.msra.mxu0 0
        %1089 = vmatprep.subr.bf16.mxu0 0
        %1090 = vmatpush1.bf16.msra.mxu0 0
        %1091 = vmatprep.subr.bf16.mxu0 0
        %1092 = vmatpush1.bf16.msra.mxu0 0
        %1093 = vmatprep.subr.bf16.mxu0 0
        %1094 = vmatpush1.bf16.msra.mxu0 0
        %1095 = vmatprep.subr.bf16.mxu0 0
        %1096 = vmatpush1.bf16.msra.mxu0 0
        %1097 = vmatprep.subr.bf16.mxu0 0
        %1098 = vmatpush1.bf16.msra.mxu0 0
        %1099 = vmatprep.subr.bf16.mxu0 0
        %1100 = vmatpush1.bf16.msra.mxu0 0
        %1101 = vmatprep.subr.bf16.mxu0 0
        %1102 = vmatpush1.bf16.msra.mxu0 0
        %1103 = vmatprep.subr.bf16.mxu0 0
        %1104 = vmatpush1.bf16.msra.mxu0 0
        %1105 = vmatprep.subr.bf16.mxu0 0
        %1106 = vmatpush1.bf16.msra.mxu0 0
        %1107 = vmatprep.subr.bf16.mxu0 0
        %1108 = vmatpush1.bf16.msra.mxu0 0
        %1109 = vmatprep.subr.bf16.mxu0 0
        %1110 = vmatpush1.bf16.msra.mxu0 0
        %1111 = vmatprep.subr.bf16.mxu0 0
        %1112 = vmatpush1.bf16.msra.mxu0 0
        %1113 = vmatprep.subr.bf16.mxu0 0
        %1114 = vmatpush1.bf16.msra.mxu0 0
        %1115 = vmatprep.subr.bf16.mxu0 0
        %1116 = vmatpush1.bf16.msra.mxu0 0
        %1117 = vmatprep.mubr.bf16.mxu0 0
        %1118 = vmatmul.mubr.bf16.gmra.mrb[0].mxu0 %v1080
        %v1119 = vpop.f32.mrb[0].mxu0
        %v1120 = vadd.f32 %v1073, %v1119
        %v1121 = vpop.f32.mrb[0].mxu0
        %v1122 = vpop.f32.mrb[0].mxu0
        %v1123 = vadd.f32 %v1076, %v1122
        %v1124 = vpop.f32.mrb[0].mxu0
        %1125 = vdwg.mxu0
        %v1126 = vld [vmem:[%s6] sm:$0x1]
        %v1128 = vlaneseq
        %v1129 = vshrl.u32 %v1128, 7
        %v1130 = vsub.s32 0, %v1129
        %v1131 = vrot.slane %v1126, %v1130
        %v1133 = vadd.f32 %v1120, %v1131
        %v1134 = vadd.f32 %v1123, %v1131
        %v1135 = vtanh.pop %v1133
        %v1136 = vtanh.pop %v1134
        %vm1137 = vcmask 261120
        %1138 = vst.msk [vmem:[#allocation2] sm:$0xff] %vm1137, %v1135
        %1139 = vst.msk [vmem:[#allocation2 + $0x8] sm:$0xff] %vm1137, %v1136
        %s1140 = scalar_lea.vmem [#allocation2], %s969
        %v1141 = vld [vmem:[%s1140] sm:$0x1]
        %v1142 = vpack.c.bf16 %v1141, %v1141
        %s1143 = scalar_lea.vmem [#allocation2], %s970
        %v1144 = vld [vmem:[%s1143] sm:$0x1]
        %v1145 = vpack.c.bf16 %v1144, %v1144
        %v1146 = vld [vmem:[#allocation14] sm:$0xf]
        %v1147 = vld [vmem:[#allocation14 + $0x4] sm:$0xf]
        %v1148 = vld [vmem:[#allocation14 + $0x8] sm:$0xf]
        %v1149 = vld [vmem:[#allocation14 + $0xc] sm:$0xf]
        %v1154 = vunpack.c.l.b16 %v1146
        %v1155 = vunpack.c.l.b16 %v1147
        %v1156 = vunpack.c.l.b16 %v1148
        %v1157 = vunpack.c.l.b16 %v1149
        %v1158 = vpack.c.b16 %v1155, %v1154
        %v1159 = vpack.c.b16 %v1157, %v1156
        %v1163 = vsel %vm1137, %v1142, 0
        %1165 = vmatprep.subr.bf16.mxu0 0
        %1166 = vmatpush1.bf16.msra.mxu0 %v1158
        %1167 = vmatprep.subr.bf16.mxu0 0
        %1168 = vmatpush1.bf16.msra.mxu0 %v1159
        %1169 = vmatprep.subr.bf16.mxu0 0
        %1170 = vmatpush1.bf16.msra.mxu0 0
        %1171 = vmatprep.subr.bf16.mxu0 0
        %1172 = vmatpush1.bf16.msra.mxu0 0
        %1173 = vmatprep.subr.bf16.mxu0 0
        %1174 = vmatpush1.bf16.msra.mxu0 0
        %1175 = vmatprep.subr.bf16.mxu0 0
        %1176 = vmatpush1.bf16.msra.mxu0 0
        %1177 = vmatprep.subr.bf16.mxu0 0
        %1178 = vmatpush1.bf16.msra.mxu0 0
        %1179 = vmatprep.subr.bf16.mxu0 0
        %1180 = vmatpush1.bf16.msra.mxu0 0
        %1181 = vmatprep.subr.bf16.mxu0 0
        %1182 = vmatpush1.bf16.msra.mxu0 0
        %1183 = vmatprep.subr.bf16.mxu0 0
        %1184 = vmatpush1.bf16.msra.mxu0 0
        %1185 = vmatprep.subr.bf16.mxu0 0
        %1186 = vmatpush1.bf16.msra.mxu0 0
        %1187 = vmatprep.subr.bf16.mxu0 0
        %1188 = vmatpush1.bf16.msra.mxu0 0
        %1189 = vmatprep.subr.bf16.mxu0 0
        %1190 = vmatpush1.bf16.msra.mxu0 0
        %1191 = vmatprep.subr.bf16.mxu0 0
        %1192 = vmatpush1.bf16.msra.mxu0 0
        %1193 = vmatprep.subr.bf16.mxu0 0
        %1194 = vmatpush1.bf16.msra.mxu0 0
        %1195 = vmatprep.subr.bf16.mxu0 0
        %1196 = vmatpush1.bf16.msra.mxu0 0
        %1197 = vmatprep.mubr.bf16.mxu0 0
        %1198 = vmatmul.mubr.bf16.gmra.mrb[0].mxu0 %v1163
        %v1199 = vpop.f32.mrb[0].mxu0
        %v1200 = vadd.f32 0.0, %v1199
        %v1201 = vpop.f32.mrb[0].mxu0
        %v1202 = vpop.f32.mrb[0].mxu0
        %v1203 = vpop.f32.mrb[0].mxu0
        %1204 = vdwg.mxu0
        %v1205 = vadd.f32 %v975, %v1200
        %v1206 = vld [vmem:[#allocation20] sm:$0xf]
        %v1207 = vld [vmem:[#allocation20 + $0x4] sm:$0xf]
        %v1208 = vld [vmem:[#allocation20 + $0x8] sm:$0xf]
        %v1209 = vld [vmem:[#allocation20 + $0xc] sm:$0xf]
        %v1214 = vunpack.c.l.b16 %v1206
        %v1215 = vunpack.c.l.b16 %v1207
        %v1216 = vunpack.c.l.b16 %v1208
        %v1217 = vunpack.c.l.b16 %v1209
        %v1218 = vpack.c.b16 %v1215, %v1214
        %v1219 = vpack.c.b16 %v1217, %v1216
        %v1223 = vsel %vm1137, %v1145, 0
        %1225 = vmatprep.subr.bf16.mxu0 0
        %1226 = vmatpush1.bf16.msra.mxu0 %v1218
        %1227 = vmatprep.subr.bf16.mxu0 0
        %1228 = vmatpush1.bf16.msra.mxu0 %v1219
        %1229 = vmatprep.subr.bf16.mxu0 0
        %1230 = vmatpush1.bf16.msra.mxu0 0
        %1231 = vmatprep.subr.bf16.mxu0 0
        %1232 = vmatpush1.bf16.msra.mxu0 0
        %1233 = vmatprep.subr.bf16.mxu0 0
        %1234 = vmatpush1.bf16.msra.mxu0 0
        %1235 = vmatprep.subr.bf16.mxu0 0
        %1236 = vmatpush1.bf16.msra.mxu0 0
        %1237 = vmatprep.subr.bf16.mxu0 0
        %1238 = vmatpush1.bf16.msra.mxu0 0
        %1239 = vmatprep.subr.bf16.mxu0 0
        %1240 = vmatpush1.bf16.msra.mxu0 0
        %1241 = vmatprep.subr.bf16.mxu0 0
        %1242 = vmatpush1.bf16.msra.mxu0 0
        %1243 = vmatprep.subr.bf16.mxu0 0
        %1244 = vmatpush1.bf16.msra.mxu0 0
        %1245 = vmatprep.subr.bf16.mxu0 0
        %1246 = vmatpush1.bf16.msra.mxu0 0
        %1247 = vmatprep.subr.bf16.mxu0 0
        %1248 = vmatpush1.bf16.msra.mxu0 0
        %1249 = vmatprep.subr.bf16.mxu0 0
        %1250 = vmatpush1.bf16.msra.mxu0 0
        %1251 = vmatprep.subr.bf16.mxu0 0
        %1252 = vmatpush1.bf16.msra.mxu0 0
        %1253 = vmatprep.subr.bf16.mxu0 0
        %1254 = vmatpush1.bf16.msra.mxu0 0
        %1255 = vmatprep.subr.bf16.mxu0 0
        %1256 = vmatpush1.bf16.msra.mxu0 0
        %1257 = vmatprep.mubr.bf16.mxu0 0
        %1258 = vmatmul.mubr.bf16.gmra.mrb[0].mxu0 %v1223
        %v1259 = vpop.f32.mrb[0].mxu0
        %v1260 = vadd.f32 0.0, %v1259
        %v1261 = vpop.f32.mrb[0].mxu0
        %v1262 = vpop.f32.mrb[0].mxu0
        %v1263 = vpop.f32.mrb[0].mxu0
        %1264 = vdwg.mxu0
        %v1265 = vadd.f32 %v1205, %v1260
        %v1266 = vpack.c.bf16 %v1136, %v1135
        %v1267 = vld [vmem:[%s7] sm:$0xf]
        %v1268 = vld [vmem:[%s7 + $0x4] sm:$0xf]
        %v1269 = vld [vmem:[%s7 + $0x8] sm:$0xf]
        %v1270 = vld [vmem:[%s7 + $0xc] sm:$0xf]
        %1271 = vmatprep.subr.bf16.mxu0 0
        %1272 = vmatpush1.bf16.msra.mxu0 %v1266
        %1273 = vmatprep.subr.bf16.mxu0 0
        %1274 = vmatpush1.bf16.msra.mxu0 0
        %1275 = vmatprep.subr.bf16.mxu0 0
        %1276 = vmatpush1.bf16.msra.mxu0 0
        %1277 = vmatprep.subr.bf16.mxu0 0
        %1278 = vmatpush1.bf16.msra.mxu0 0
        %1279 = vmatprep.subr.bf16.mxu0 0
        %1280 = vmatpush1.bf16.msra.mxu0 0
        %1281 = vmatprep.subr.bf16.mxu0 0
        %1282 = vmatpush1.bf16.msra.mxu0 0
        %1283 = vmatprep.subr.bf16.mxu0 0
        %1284 = vmatpush1.bf16.msra.mxu0 0
        %1285 = vmatprep.subr.bf16.mxu0 0
        %1286 = vmatpush1.bf16.msra.mxu0 0
        %1287 = vmatprep.subr.bf16.mxu0 0
        %1288 = vmatpush1.bf16.msra.mxu0 0
        %1289 = vmatprep.subr.bf16.mxu0 0
        %1290 = vmatpush1.bf16.msra.mxu0 0
        %1291 = vmatprep.subr.bf16.mxu0 0
        %1292 = vmatpush1.bf16.msra.mxu0 0
        %1293 = vmatprep.subr.bf16.mxu0 0
        %1294 = vmatpush1.bf16.msra.mxu0 0
        %1295 = vmatprep.subr.bf16.mxu0 0
        %1296 = vmatpush1.bf16.msra.mxu0 0
        %1297 = vmatprep.subr.bf16.mxu0 0
        %1298 = vmatpush1.bf16.msra.mxu0 0
        %1299 = vmatprep.subr.bf16.mxu0 0
        %1300 = vmatpush1.bf16.msra.mxu0 0
        %1301 = vmatprep.subr.bf16.mxu0 0
        %1302 = vmatpush1.bf16.msra.mxu0 0
        %1303 = vmatprep.mubr.bf16.mxu0 0
        %1304 = vmatmul.mubr.bf16.gmra.mrb[0].mxu0 %v985
        %v1305 = vpop.f32.mrb[0].mxu0
        %v1306 = vadd.f32 0.0, %v1305
        %v1307 = vpop.f32.mrb[0].mxu0
        %v1308 = vpop.f32.mrb[0].mxu0
        %v1309 = vadd.f32 0.0, %v1308
        %v1310 = vpop.f32.mrb[0].mxu0
        %1311 = vdwg.mxu0
        %v1312 = vpack.c.bf16 %v1309, %v1306
        %v1313 = vld [vmem:[%s8] sm:$0xf]
        %v1314 = vld [vmem:[%s8 + $0x4] sm:$0xf]
        %v1315 = vld [vmem:[%s8 + $0x8] sm:$0xf]
        %v1316 = vld [vmem:[%s8 + $0xc] sm:$0xf]
        %v1321 = vunpack.c.l.b16 %v1313
        %v1322 = vunpack.c.l.b16 %v1314
        %v1323 = vunpack.c.l.b16 %v1315
        %v1324 = vunpack.c.l.b16 %v1316
        %v1325 = vpack.c.b16 %v1322, %v1321
        %v1326 = vpack.c.b16 %v1324, %v1323
        %v1330 = vsel %vm1137, %v1312, 0
        %1332 = vmatprep.subr.bf16.mxu0 0
        %1333 = vmatpush1.bf16.msra.mxu0 %v1325
        %1334 = vmatprep.subr.bf16.mxu0 0
        %1335 = vmatpush1.bf16.msra.mxu0 %v1326
        %1336 = vmatprep.subr.bf16.mxu0 0
        %1337 = vmatpush1.bf16.msra.mxu0 0
        %1338 = vmatprep.subr.bf16.mxu0 0
        %1339 = vmatpush1.bf16.msra.mxu0 0
        %1340 = vmatprep.subr.bf16.mxu0 0
        %1341 = vmatpush1.bf16.msra.mxu0 0
        %1342 = vmatprep.subr.bf16.mxu0 0
        %1343 = vmatpush1.bf16.msra.mxu0 0
        %1344 = vmatprep.subr.bf16.mxu0 0
        %1345 = vmatpush1.bf16.msra.mxu0 0
        %1346 = vmatprep.subr.bf16.mxu0 0
        %1347 = vmatpush1.bf16.msra.mxu0 0
        %1348 = vmatprep.subr.bf16.mxu0 0
        %1349 = vmatpush1.bf16.msra.mxu0 0
        %1350 = vmatprep.subr.bf16.mxu0 0
        %1351 = vmatpush1.bf16.msra.mxu0 0
        %1352 = vmatprep.subr.bf16.mxu0 0
        %1353 = vmatpush1.bf16.msra.mxu0 0
        %1354 = vmatprep.subr.bf16.mxu0 0
        %1355 = vmatpush1.bf16.msra.mxu0 0
        %1356 = vmatprep.subr.bf16.mxu0 0
        %1357 = vmatpush1.bf16.msra.mxu0 0
        %1358 = vmatprep.subr.bf16.mxu0 0
        %1359 = vmatpush1.bf16.msra.mxu0 0
        %1360 = vmatprep.subr.bf16.mxu0 0
        %1361 = vmatpush1.bf16.msra.mxu0 0
        %1362 = vmatprep.subr.bf16.mxu0 0
        %1363 = vmatpush1.bf16.msra.mxu0 0
        %1364 = vmatprep.mubr.bf16.mxu0 0
        %1365 = vmatmul.mubr.bf16.gmra.mrb[0].mxu0 %v1330
        %v1366 = vpop.f32.mrb[0].mxu0
        %v1367 = vadd.f32 0.0, %v1366
        %v1368 = vpop.f32.mrb[0].mxu0
        %v1369 = vpop.f32.mrb[0].mxu0
        %v1370 = vadd.f32 0.0, %v1369
        %v1371 = vpop.f32.mrb[0].mxu0
        %1372 = vdwg.mxu0
        %v1377 = vunpack.c.l.b16 %v1267
        %v1378 = vunpack.c.l.b16 %v1268
        %v1379 = vunpack.c.l.b16 %v1269
        %v1380 = vunpack.c.l.b16 %v1270
        %v1381 = vpack.c.b16 %v1378, %v1377
        %v1382 = vpack.c.b16 %v1380, %v1379
        %v1386 = vsel %vm1137, %v1266, 0
        %1388 = vmatprep.subr.bf16.mxu0 0
        %1389 = vmatpush1.bf16.msra.mxu0 %v1381
        %1390 = vmatprep.subr.bf16.mxu0 0
        %1391 = vmatpush1.bf16.msra.mxu0 %v1382
        %1392 = vmatprep.subr.bf16.mxu0 0
        %1393 = vmatpush1.bf16.msra.mxu0 0
        %1394 = vmatprep.subr.bf16.mxu0 0
        %1395 = vmatpush1.bf16.msra.mxu0 0
        %1396 = vmatprep.subr.bf16.mxu0 0
        %1397 = vmatpush1.bf16.msra.mxu0 0
        %1398 = vmatprep.subr.bf16.mxu0 0
        %1399 = vmatpush1.bf16.msra.mxu0 0
        %1400 = vmatprep.subr.bf16.mxu0 0
        %1401 = vmatpush1.bf16.msra.mxu0 0
        %1402 = vmatprep.subr.bf16.mxu0 0
        %1403 = vmatpush1.bf16.msra.mxu0 0
        %1404 = vmatprep.subr.bf16.mxu0 0
        %1405 = vmatpush1.bf16.msra.mxu0 0
        %1406 = vmatprep.subr.bf16.mxu0 0
        %1407 = vmatpush1.bf16.msra.mxu0 0
        %1408 = vmatprep.subr.bf16.mxu0 0
        %1409 = vmatpush1.bf16.msra.mxu0 0
        %1410 = vmatprep.subr.bf16.mxu0 0
        %1411 = vmatpush1.bf16.msra.mxu0 0
        %1412 = vmatprep.subr.bf16.mxu0 0
        %1413 = vmatpush1.bf16.msra.mxu0 0
        %1414 = vmatprep.subr.bf16.mxu0 0
        %1415 = vmatpush1.bf16.msra.mxu0 0
        %1416 = vmatprep.subr.bf16.mxu0 0
        %1417 = vmatpush1.bf16.msra.mxu0 0
        %1418 = vmatprep.subr.bf16.mxu0 0
        %1419 = vmatpush1.bf16.msra.mxu0 0
        %1420 = vmatprep.mubr.bf16.mxu0 0
        %1421 = vmatmul.mubr.bf16.gmra.mrb[0].mxu0 %v1386
        %v1422 = vpop.f32.mrb[0].mxu0
        %v1423 = vadd.f32 %v1367, %v1422
        %v1424 = vpop.f32.mrb[0].mxu0
        %v1425 = vpop.f32.mrb[0].mxu0
        %v1426 = vadd.f32 %v1370, %v1425
        %v1427 = vpop.f32.mrb[0].mxu0
        %1428 = vdwg.mxu0
        %v1429 = vld [vmem:[%s9] sm:$0x1]
        %v1431 = vlaneseq
        %v1432 = vshrl.u32 %v1431, 7
        %v1433 = vsub.s32 0, %v1432
        %v1434 = vrot.slane %v1429, %v1433
        %v1436 = vadd.f32 %v1423, %v1434
        %v1437 = vadd.f32 %v1426, %v1434
        %v1438 = vtanh.pop %v1436
        %v1439 = vtanh.pop %v1437
        %1440 = vst.msk [vmem:[#allocation2] sm:$0xff] %vm1137, %v1438
        %1441 = vst.msk [vmem:[#allocation2 + $0x8] sm:$0xff] %vm1137, %v1439
        %v1442 = vld [vmem:[%s1140] sm:$0x1]
        %v1443 = vpack.c.bf16 %v1442, %v1442
        %v1444 = vld [vmem:[%s1143] sm:$0x1]
        %v1445 = vpack.c.bf16 %v1444, %v1444
        %v1446 = vld [vmem:[#allocation15] sm:$0xf]
        %v1447 = vld [vmem:[#allocation15 + $0x4] sm:$0xf]
        %v1448 = vld [vmem:[#allocation15 + $0x8] sm:$0xf]
        %v1449 = vld [vmem:[#allocation15 + $0xc] sm:$0xf]
        %v1454 = vunpack.c.l.b16 %v1446
        %v1455 = vunpack.c.l.b16 %v1447
        %v1456 = vunpack.c.l.b16 %v1448
        %v1457 = vunpack.c.l.b16 %v1449
        %v1458 = vpack.c.b16 %v1455, %v1454
        %v1459 = vpack.c.b16 %v1457, %v1456
        %v1463 = vsel %vm1137, %v1443, 0
        %1465 = vmatprep.subr.bf16.mxu0 0
        %1466 = vmatpush1.bf16.msra.mxu0 %v1458
        %1467 = vmatprep.subr.bf16.mxu0 0
        %1468 = vmatpush1.bf16.msra.mxu0 %v1459
        %1469 = vmatprep.subr.bf16.mxu0 0
        %1470 = vmatpush1.bf16.msra.mxu0 0
        %1471 = vmatprep.subr.bf16.mxu0 0
        %1472 = vmatpush1.bf16.msra.mxu0 0
        %1473 = vmatprep.subr.bf16.mxu0 0
        %1474 = vmatpush1.bf16.msra.mxu0 0
        %1475 = vmatprep.subr.bf16.mxu0 0
        %1476 = vmatpush1.bf16.msra.mxu0 0
        %1477 = vmatprep.subr.bf16.mxu0 0
        %1478 = vmatpush1.bf16.msra.mxu0 0
        %1479 = vmatprep.subr.bf16.mxu0 0
        %1480 = vmatpush1.bf16.msra.mxu0 0
        %1481 = vmatprep.subr.bf16.mxu0 0
        %1482 = vmatpush1.bf16.msra.mxu0 0
        %1483 = vmatprep.subr.bf16.mxu0 0
        %1484 = vmatpush1.bf16.msra.mxu0 0
        %1485 = vmatprep.subr.bf16.mxu0 0
        %1486 = vmatpush1.bf16.msra.mxu0 0
        %1487 = vmatprep.subr.bf16.mxu0 0
        %1488 = vmatpush1.bf16.msra.mxu0 0
        %1489 = vmatprep.subr.bf16.mxu0 0
        %1490 = vmatpush1.bf16.msra.mxu0 0
        %1491 = vmatprep.subr.bf16.mxu0 0
        %1492 = vmatpush1.bf16.msra.mxu0 0
        %1493 = vmatprep.subr.bf16.mxu0 0
        %1494 = vmatpush1.bf16.msra.mxu0 0
        %1495 = vmatprep.subr.bf16.mxu0 0
        %1496 = vmatpush1.bf16.msra.mxu0 0
        %1497 = vmatprep.mubr.bf16.mxu0 0
        %1498 = vmatmul.mubr.bf16.gmra.mrb[0].mxu0 %v1463
        %v1499 = vpop.f32.mrb[0].mxu0
        %v1500 = vadd.f32 0.0, %v1499
        %v1501 = vpop.f32.mrb[0].mxu0
        %v1502 = vpop.f32.mrb[0].mxu0
        %v1503 = vpop.f32.mrb[0].mxu0
        %1504 = vdwg.mxu0
        %v1505 = vadd.f32 %v1265, %v1500
        %v1506 = vld [vmem:[#allocation21] sm:$0xf]
        %v1507 = vld [vmem:[#allocation21 + $0x4] sm:$0xf]
        %v1508 = vld [vmem:[#allocation21 + $0x8] sm:$0xf]
        %v1509 = vld [vmem:[#allocation21 + $0xc] sm:$0xf]
        %v1514 = vunpack.c.l.b16 %v1506
        %v1515 = vunpack.c.l.b16 %v1507
        %v1516 = vunpack.c.l.b16 %v1508
        %v1517 = vunpack.c.l.b16 %v1509
        %v1518 = vpack.c.b16 %v1515, %v1514
        %v1519 = vpack.c.b16 %v1517, %v1516
        %v1523 = vsel %vm1137, %v1445, 0
        %1525 = vmatprep.subr.bf16.mxu0 0
        %1526 = vmatpush1.bf16.msra.mxu0 %v1518
        %1527 = vmatprep.subr.bf16.mxu0 0
        %1528 = vmatpush1.bf16.msra.mxu0 %v1519
        %1529 = vmatprep.subr.bf16.mxu0 0
        %1530 = vmatpush1.bf16.msra.mxu0 0
        %1531 = vmatprep.subr.bf16.mxu0 0
        %1532 = vmatpush1.bf16.msra.mxu0 0
        %1533 = vmatprep.subr.bf16.mxu0 0
        %1534 = vmatpush1.bf16.msra.mxu0 0
        %1535 = vmatprep.subr.bf16.mxu0 0
        %1536 = vmatpush1.bf16.msra.mxu0 0
        %1537 = vmatprep.subr.bf16.mxu0 0
        %1538 = vmatpush1.bf16.msra.mxu0 0
        %1539 = vmatprep.subr.bf16.mxu0 0
        %1540 = vmatpush1.bf16.msra.mxu0 0
        %1541 = vmatprep.subr.bf16.mxu0 0
        %1542 = vmatpush1.bf16.msra.mxu0 0
        %1543 = vmatprep.subr.bf16.mxu0 0
        %1544 = vmatpush1.bf16.msra.mxu0 0
        %1545 = vmatprep.subr.bf16.mxu0 0
        %1546 = vmatpush1.bf16.msra.mxu0 0
        %1547 = vmatprep.subr.bf16.mxu0 0
        %1548 = vmatpush1.bf16.msra.mxu0 0
        %1549 = vmatprep.subr.bf16.mxu0 0
        %1550 = vmatpush1.bf16.msra.mxu0 0
        %1551 = vmatprep.subr.bf16.mxu0 0
        %1552 = vmatpush1.bf16.msra.mxu0 0
        %1553 = vmatprep.subr.bf16.mxu0 0
        %1554 = vmatpush1.bf16.msra.mxu0 0
        %1555 = vmatprep.subr.bf16.mxu0 0
        %1556 = vmatpush1.bf16.msra.mxu0 0
        %1557 = vmatprep.mubr.bf16.mxu0 0
        %1558 = vmatmul.mubr.bf16.gmra.mrb[0].mxu0 %v1523
        %v1559 = vpop.f32.mrb[0].mxu0
        %v1560 = vadd.f32 0.0, %v1559
        %v1561 = vpop.f32.mrb[0].mxu0
        %v1562 = vpop.f32.mrb[0].mxu0
        %v1563 = vpop.f32.mrb[0].mxu0
        %1564 = vdwg.mxu0
        %v1565 = vadd.f32 %v1505, %v1560
        %v1566 = vpack.c.bf16 %v1439, %v1438
        %v1567 = vld [vmem:[#allocation6] sm:$0xf]
        %v1568 = vld [vmem:[#allocation6 + $0x4] sm:$0xf]
        %v1569 = vld [vmem:[#allocation6 + $0x8] sm:$0xf]
        %v1570 = vld [vmem:[#allocation6 + $0xc] sm:$0xf]
        %1571 = vmatprep.subr.bf16.mxu0 0
        %1572 = vmatpush1.bf16.msra.mxu0 %v1566
        %1573 = vmatprep.subr.bf16.mxu0 0
        %1574 = vmatpush1.bf16.msra.mxu0 0
        %1575 = vmatprep.subr.bf16.mxu0 0
        %1576 = vmatpush1.bf16.msra.mxu0 0
        %1577 = vmatprep.subr.bf16.mxu0 0
        %1578 = vmatpush1.bf16.msra.mxu0 0
        %1579 = vmatprep.subr.bf16.mxu0 0
        %1580 = vmatpush1.bf16.msra.mxu0 0
        %1581 = vmatprep.subr.bf16.mxu0 0
        %1582 = vmatpush1.bf16.msra.mxu0 0
        %1583 = vmatprep.subr.bf16.mxu0 0
        %1584 = vmatpush1.bf16.msra.mxu0 0
        %1585 = vmatprep.subr.bf16.mxu0 0
        %1586 = vmatpush1.bf16.msra.mxu0 0
        %1587 = vmatprep.subr.bf16.mxu0 0
        %1588 = vmatpush1.bf16.msra.mxu0 0
        %1589 = vmatprep.subr.bf16.mxu0 0
        %1590 = vmatpush1.bf16.msra.mxu0 0
        %1591 = vmatprep.subr.bf16.mxu0 0
        %1592 = vmatpush1.bf16.msra.mxu0 0
        %1593 = vmatprep.subr.bf16.mxu0 0
        %1594 = vmatpush1.bf16.msra.mxu0 0
        %1595 = vmatprep.subr.bf16.mxu0 0
        %1596 = vmatpush1.bf16.msra.mxu0 0
        %1597 = vmatprep.subr.bf16.mxu0 0
        %1598 = vmatpush1.bf16.msra.mxu0 0
        %1599 = vmatprep.subr.bf16.mxu0 0
        %1600 = vmatpush1.bf16.msra.mxu0 0
        %1601 = vmatprep.subr.bf16.mxu0 0
        %1602 = vmatpush1.bf16.msra.mxu0 0
        %1603 = vmatprep.mubr.bf16.mxu0 0
        %1604 = vmatmul.mubr.bf16.gmra.mrb[0].mxu0 %v985
        %v1605 = vpop.f32.mrb[0].mxu0
        %v1606 = vadd.f32 0.0, %v1605
        %v1607 = vpop.f32.mrb[0].mxu0
        %v1608 = vpop.f32.mrb[0].mxu0
        %v1609 = vadd.f32 0.0, %v1608
        %v1610 = vpop.f32.mrb[0].mxu0
        %1611 = vdwg.mxu0
        %v1612 = vpack.c.bf16 %v1609, %v1606
        %v1613 = vld [vmem:[#allocation9] sm:$0xf]
        %v1614 = vld [vmem:[#allocation9 + $0x4] sm:$0xf]
        %v1615 = vld [vmem:[#allocation9 + $0x8] sm:$0xf]
        %v1616 = vld [vmem:[#allocation9 + $0xc] sm:$0xf]
        %v1621 = vunpack.c.l.b16 %v1613
        %v1622 = vunpack.c.l.b16 %v1614
        %v1623 = vunpack.c.l.b16 %v1615
        %v1624 = vunpack.c.l.b16 %v1616
        %v1625 = vpack.c.b16 %v1622, %v1621
        %v1626 = vpack.c.b16 %v1624, %v1623
        %v1630 = vsel %vm1137, %v1612, 0
        %1632 = vmatprep.subr.bf16.mxu0 0
        %1633 = vmatpush1.bf16.msra.mxu0 %v1625
        %1634 = vmatprep.subr.bf16.mxu0 0
        %1635 = vmatpush1.bf16.msra.mxu0 %v1626
        %1636 = vmatprep.subr.bf16.mxu0 0
        %1637 = vmatpush1.bf16.msra.mxu0 0
        %1638 = vmatprep.subr.bf16.mxu0 0
        %1639 = vmatpush1.bf16.msra.mxu0 0
        %1640 = vmatprep.subr.bf16.mxu0 0
        %1641 = vmatpush1.bf16.msra.mxu0 0
        %1642 = vmatprep.subr.bf16.mxu0 0
        %1643 = vmatpush1.bf16.msra.mxu0 0
        %1644 = vmatprep.subr.bf16.mxu0 0
        %1645 = vmatpush1.bf16.msra.mxu0 0
        %1646 = vmatprep.subr.bf16.mxu0 0
        %1647 = vmatpush1.bf16.msra.mxu0 0
        %1648 = vmatprep.subr.bf16.mxu0 0
        %1649 = vmatpush1.bf16.msra.mxu0 0
        %1650 = vmatprep.subr.bf16.mxu0 0
        %1651 = vmatpush1.bf16.msra.mxu0 0
        %1652 = vmatprep.subr.bf16.mxu0 0
        %1653 = vmatpush1.bf16.msra.mxu0 0
        %1654 = vmatprep.subr.bf16.mxu0 0
        %1655 = vmatpush1.bf16.msra.mxu0 0
        %1656 = vmatprep.subr.bf16.mxu0 0
        %1657 = vmatpush1.bf16.msra.mxu0 0
        %1658 = vmatprep.subr.bf16.mxu0 0
        %1659 = vmatpush1.bf16.msra.mxu0 0
        %1660 = vmatprep.subr.bf16.mxu0 0
        %1661 = vmatpush1.bf16.msra.mxu0 0
        %1662 = vmatprep.subr.bf16.mxu0 0
        %1663 = vmatpush1.bf16.msra.mxu0 0
        %1664 = vmatprep.mubr.bf16.mxu0 0
        %1665 = vmatmul.mubr.bf16.gmra.mrb[0].mxu0 %v1630
        %v1666 = vpop.f32.mrb[0].mxu0
        %v1667 = vadd.f32 0.0, %v1666
        %v1668 = vpop.f32.mrb[0].mxu0
        %v1669 = vpop.f32.mrb[0].mxu0
        %v1670 = vadd.f32 0.0, %v1669
        %v1671 = vpop.f32.mrb[0].mxu0
        %1672 = vdwg.mxu0
        %v1677 = vunpack.c.l.b16 %v1567
        %v1678 = vunpack.c.l.b16 %v1568
        %v1679 = vunpack.c.l.b16 %v1569
        %v1680 = vunpack.c.l.b16 %v1570
        %v1681 = vpack.c.b16 %v1678, %v1677
        %v1682 = vpack.c.b16 %v1680, %v1679
        %v1686 = vsel %vm1137, %v1566, 0
        %1688 = vmatprep.subr.bf16.mxu0 0
        %1689 = vmatpush1.bf16.msra.mxu0 %v1681
        %1690 = vmatprep.subr.bf16.mxu0 0
        %1691 = vmatpush1.bf16.msra.mxu0 %v1682
        %1692 = vmatprep.subr.bf16.mxu0 0
        %1693 = vmatpush1.bf16.msra.mxu0 0
        %1694 = vmatprep.subr.bf16.mxu0 0
        %1695 = vmatpush1.bf16.msra.mxu0 0
        %1696 = vmatprep.subr.bf16.mxu0 0
        %1697 = vmatpush1.bf16.msra.mxu0 0
        %1698 = vmatprep.subr.bf16.mxu0 0
        %1699 = vmatpush1.bf16.msra.mxu0 0
        %1700 = vmatprep.subr.bf16.mxu0 0
        %1701 = vmatpush1.bf16.msra.mxu0 0
        %1702 = vmatprep.subr.bf16.mxu0 0
        %1703 = vmatpush1.bf16.msra.mxu0 0
        %1704 = vmatprep.subr.bf16.mxu0 0
        %1705 = vmatpush1.bf16.msra.mxu0 0
        %1706 = vmatprep.subr.bf16.mxu0 0
        %1707 = vmatpush1.bf16.msra.mxu0 0
        %1708 = vmatprep.subr.bf16.mxu0 0
        %1709 = vmatpush1.bf16.msra.mxu0 0
        %1710 = vmatprep.subr.bf16.mxu0 0
        %1711 = vmatpush1.bf16.msra.mxu0 0
        %1712 = vmatprep.subr.bf16.mxu0 0
        %1713 = vmatpush1.bf16.msra.mxu0 0
        %1714 = vmatprep.subr.bf16.mxu0 0
        %1715 = vmatpush1.bf16.msra.mxu0 0
        %1716 = vmatprep.subr.bf16.mxu0 0
        %1717 = vmatpush1.bf16.msra.mxu0 0
        %1718 = vmatprep.subr.bf16.mxu0 0
        %1719 = vmatpush1.bf16.msra.mxu0 0
        %1720 = vmatprep.mubr.bf16.mxu0 0
        %1721 = vmatmul.mubr.bf16.gmra.mrb[0].mxu0 %v1686
        %v1722 = vpop.f32.mrb[0].mxu0
        %v1723 = vadd.f32 %v1667, %v1722
        %v1724 = vpop.f32.mrb[0].mxu0
        %v1725 = vpop.f32.mrb[0].mxu0
        %v1726 = vadd.f32 %v1670, %v1725
        %v1727 = vpop.f32.mrb[0].mxu0
        %1728 = vdwg.mxu0
        %v1729 = vld [vmem:[%s12] sm:$0x1]
        %v1731 = vlaneseq
        %v1732 = vshrl.u32 %v1731, 7
        %v1733 = vsub.s32 0, %v1732
        %v1734 = vrot.slane %v1729, %v1733
        %v1736 = vadd.f32 %v1723, %v1734
        %v1737 = vadd.f32 %v1726, %v1734
        %v1738 = vtanh.pop %v1736
        %v1739 = vtanh.pop %v1737
        %1740 = vst.msk [vmem:[#allocation2] sm:$0xff] %vm1137, %v1738
        %1741 = vst.msk [vmem:[#allocation2 + $0x8] sm:$0xff] %vm1137, %v1739
        %v1742 = vld [vmem:[%s1140] sm:$0x1]
        %v1743 = vpack.c.bf16 %v1742, %v1742
        %v1744 = vld [vmem:[%s1143] sm:$0x1]
        %v1745 = vpack.c.bf16 %v1744, %v1744
        %v1746 = vld [vmem:[#allocation17] sm:$0xf]
        %v1747 = vld [vmem:[#allocation17 + $0x4] sm:$0xf]
        %v1748 = vld [vmem:[#allocation17 + $0x8] sm:$0xf]
        %v1749 = vld [vmem:[#allocation17 + $0xc] sm:$0xf]
        %v1754 = vunpack.c.l.b16 %v1746
        %v1755 = vunpack.c.l.b16 %v1747
        %v1756 = vunpack.c.l.b16 %v1748
        %v1757 = vunpack.c.l.b16 %v1749
        %v1758 = vpack.c.b16 %v1755, %v1754
        %v1759 = vpack.c.b16 %v1757, %v1756
        %v1763 = vsel %vm1137, %v1743, 0
        %1765 = vmatprep.subr.bf16.mxu0 0
        %1766 = vmatpush1.bf16.msra.mxu0 %v1758
        %1767 = vmatprep.subr.bf16.mxu0 0
        %1768 = vmatpush1.bf16.msra.mxu0 %v1759
        %1769 = vmatprep.subr.bf16.mxu0 0
        %1770 = vmatpush1.bf16.msra.mxu0 0
        %1771 = vmatprep.subr.bf16.mxu0 0
        %1772 = vmatpush1.bf16.msra.mxu0 0
        %1773 = vmatprep.subr.bf16.mxu0 0
        %1774 = vmatpush1.bf16.msra.mxu0 0
        %1775 = vmatprep.subr.bf16.mxu0 0
        %1776 = vmatpush1.bf16.msra.mxu0 0
        %1777 = vmatprep.subr.bf16.mxu0 0
        %1778 = vmatpush1.bf16.msra.mxu0 0
        %1779 = vmatprep.subr.bf16.mxu0 0
        %1780 = vmatpush1.bf16.msra.mxu0 0
        %1781 = vmatprep.subr.bf16.mxu0 0
        %1782 = vmatpush1.bf16.msra.mxu0 0
        %1783 = vmatprep.subr.bf16.mxu0 0
        %1784 = vmatpush1.bf16.msra.mxu0 0
        %1785 = vmatprep.subr.bf16.mxu0 0
        %1786 = vmatpush1.bf16.msra.mxu0 0
        %1787 = vmatprep.subr.bf16.mxu0 0
        %1788 = vmatpush1.bf16.msra.mxu0 0
        %1789 = vmatprep.subr.bf16.mxu0 0
        %1790 = vmatpush1.bf16.msra.mxu0 0
        %1791 = vmatprep.subr.bf16.mxu0 0
        %1792 = vmatpush1.bf16.msra.mxu0 0
        %1793 = vmatprep.subr.bf16.mxu0 0
        %1794 = vmatpush1.bf16.msra.mxu0 0
        %1795 = vmatprep.subr.bf16.mxu0 0
        %1796 = vmatpush1.bf16.msra.mxu0 0
        %1797 = vmatprep.mubr.bf16.mxu0 0
        %1798 = vmatmul.mubr.bf16.gmra.mrb[0].mxu0 %v1763
        %v1799 = vpop.f32.mrb[0].mxu0
        %v1800 = vadd.f32 0.0, %v1799
        %v1801 = vpop.f32.mrb[0].mxu0
        %v1802 = vpop.f32.mrb[0].mxu0
        %v1803 = vpop.f32.mrb[0].mxu0
        %1804 = vdwg.mxu0
        %v1805 = vadd.f32 %v1565, %v1800
        %v1806 = vld [vmem:[#allocation23] sm:$0xf]
        %v1807 = vld [vmem:[#allocation23 + $0x4] sm:$0xf]
        %v1808 = vld [vmem:[#allocation23 + $0x8] sm:$0xf]
        %v1809 = vld [vmem:[#allocation23 + $0xc] sm:$0xf]
        %v1814 = vunpack.c.l.b16 %v1806
        %v1815 = vunpack.c.l.b16 %v1807
        %v1816 = vunpack.c.l.b16 %v1808
        %v1817 = vunpack.c.l.b16 %v1809
        %v1818 = vpack.c.b16 %v1815, %v1814
        %v1819 = vpack.c.b16 %v1817, %v1816
        %v1823 = vsel %vm1137, %v1745, 0
        %1825 = vmatprep.subr.bf16.mxu0 0
        %1826 = vmatpush1.bf16.msra.mxu0 %v1818
        %1827 = vmatprep.subr.bf16.mxu0 0
        %1828 = vmatpush1.bf16.msra.mxu0 %v1819
        %1829 = vmatprep.subr.bf16.mxu0 0
        %1830 = vmatpush1.bf16.msra.mxu0 0
        %1831 = vmatprep.subr.bf16.mxu0 0
        %1832 = vmatpush1.bf16.msra.mxu0 0
        %1833 = vmatprep.subr.bf16.mxu0 0
        %1834 = vmatpush1.bf16.msra.mxu0 0
        %1835 = vmatprep.subr.bf16.mxu0 0
        %1836 = vmatpush1.bf16.msra.mxu0 0
        %1837 = vmatprep.subr.bf16.mxu0 0
        %1838 = vmatpush1.bf16.msra.mxu0 0
        %1839 = vmatprep.subr.bf16.mxu0 0
        %1840 = vmatpush1.bf16.msra.mxu0 0
        %1841 = vmatprep.subr.bf16.mxu0 0
        %1842 = vmatpush1.bf16.msra.mxu0 0
        %1843 = vmatprep.subr.bf16.mxu0 0
        %1844 = vmatpush1.bf16.msra.mxu0 0
        %1845 = vmatprep.subr.bf16.mxu0 0
        %1846 = vmatpush1.bf16.msra.mxu0 0
        %1847 = vmatprep.subr.bf16.mxu0 0
        %1848 = vmatpush1.bf16.msra.mxu0 0
        %1849 = vmatprep.subr.bf16.mxu0 0
        %1850 = vmatpush1.bf16.msra.mxu0 0
        %1851 = vmatprep.subr.bf16.mxu0 0
        %1852 = vmatpush1.bf16.msra.mxu0 0
        %1853 = vmatprep.subr.bf16.mxu0 0
        %1854 = vmatpush1.bf16.msra.mxu0 0
        %1855 = vmatprep.subr.bf16.mxu0 0
        %1856 = vmatpush1.bf16.msra.mxu0 0
        %1857 = vmatprep.mubr.bf16.mxu0 0
        %1858 = vmatmul.mubr.bf16.gmra.mrb[0].mxu0 %v1823
        %v1859 = vpop.f32.mrb[0].mxu0
        %v1860 = vadd.f32 0.0, %v1859
        %v1861 = vpop.f32.mrb[0].mxu0
        %v1862 = vpop.f32.mrb[0].mxu0
        %v1863 = vpop.f32.mrb[0].mxu0
        %1864 = vdwg.mxu0
        %v1865 = vadd.f32 %v1805, %v1860
        %v1866 = vpack.c.bf16 %v1739, %v1738
        %v1867 = vld [vmem:[#allocation11] sm:$0xf]
        %v1868 = vld [vmem:[#allocation11 + $0x4] sm:$0xf]
        %v1869 = vld [vmem:[#allocation11 + $0x8] sm:$0xf]
        %v1870 = vld [vmem:[#allocation11 + $0xc] sm:$0xf]
        %1871 = vmatprep.subr.bf16.mxu0 0
        %1872 = vmatpush1.bf16.msra.mxu0 %v1866
        %1873 = vmatprep.subr.bf16.mxu0 0
        %1874 = vmatpush1.bf16.msra.mxu0 0
        %1875 = vmatprep.subr.bf16.mxu0 0
        %1876 = vmatpush1.bf16.msra.mxu0 0
        %1877 = vmatprep.subr.bf16.mxu0 0
        %1878 = vmatpush1.bf16.msra.mxu0 0
        %1879 = vmatprep.subr.bf16.mxu0 0
        %1880 = vmatpush1.bf16.msra.mxu0 0
        %1881 = vmatprep.subr.bf16.mxu0 0
        %1882 = vmatpush1.bf16.msra.mxu0 0
        %1883 = vmatprep.subr.bf16.mxu0 0
        %1884 = vmatpush1.bf16.msra.mxu0 0
        %1885 = vmatprep.subr.bf16.mxu0 0
        %1886 = vmatpush1.bf16.msra.mxu0 0
        %1887 = vmatprep.subr.bf16.mxu0 0
        %1888 = vmatpush1.bf16.msra.mxu0 0
        %1889 = vmatprep.subr.bf16.mxu0 0
        %1890 = vmatpush1.bf16.msra.mxu0 0
        %1891 = vmatprep.subr.bf16.mxu0 0
        %1892 = vmatpush1.bf16.msra.mxu0 0
        %1893 = vmatprep.subr.bf16.mxu0 0
        %1894 = vmatpush1.bf16.msra.mxu0 0
        %1895 = vmatprep.subr.bf16.mxu0 0
        %1896 = vmatpush1.bf16.msra.mxu0 0
        %1897 = vmatprep.subr.bf16.mxu0 0
        %1898 = vmatpush1.bf16.msra.mxu0 0
        %1899 = vmatprep.subr.bf16.mxu0 0
        %1900 = vmatpush1.bf16.msra.mxu0 0
        %1901 = vmatprep.subr.bf16.mxu0 0
        %1902 = vmatpush1.bf16.msra.mxu0 0
        %1903 = vmatprep.mubr.bf16.mxu0 0
        %1904 = vmatmul.mubr.bf16.gmra.mrb[0].mxu0 %v985
        %v1905 = vpop.f32.mrb[0].mxu0
        %v1906 = vadd.f32 0.0, %v1905
        %v1907 = vpop.f32.mrb[0].mxu0
        %v1908 = vpop.f32.mrb[0].mxu0
        %v1909 = vadd.f32 0.0, %v1908
        %v1910 = vpop.f32.mrb[0].mxu0
        %1911 = vdwg.mxu0
        %v1912 = vpack.c.bf16 %v1909, %v1906
        %v1913 = vld [vmem:[#allocation12] sm:$0xf]
        %v1914 = vld [vmem:[#allocation12 + $0x4] sm:$0xf]
        %v1915 = vld [vmem:[#allocation12 + $0x8] sm:$0xf]
        %v1916 = vld [vmem:[#allocation12 + $0xc] sm:$0xf]
        %v1921 = vunpack.c.l.b16 %v1913
        %v1922 = vunpack.c.l.b16 %v1914
        %v1923 = vunpack.c.l.b16 %v1915
        %v1924 = vunpack.c.l.b16 %v1916
        %v1925 = vpack.c.b16 %v1922, %v1921
        %v1926 = vpack.c.b16 %v1924, %v1923
        %v1930 = vsel %vm1137, %v1912, 0
        %1932 = vmatprep.subr.bf16.mxu0 0
        %1933 = vmatpush1.bf16.msra.mxu0 %v1925
        %1934 = vmatprep.subr.bf16.mxu0 0
        %1935 = vmatpush1.bf16.msra.mxu0 %v1926
        %1936 = vmatprep.subr.bf16.mxu0 0
        %1937 = vmatpush1.bf16.msra.mxu0 0
        %1938 = vmatprep.subr.bf16.mxu0 0
        %1939 = vmatpush1.bf16.msra.mxu0 0
        %1940 = vmatprep.subr.bf16.mxu0 0
        %1941 = vmatpush1.bf16.msra.mxu0 0
        %1942 = vmatprep.subr.bf16.mxu0 0
        %1943 = vmatpush1.bf16.msra.mxu0 0
        %1944 = vmatprep.subr.bf16.mxu0 0
        %1945 = vmatpush1.bf16.msra.mxu0 0
        %1946 = vmatprep.subr.bf16.mxu0 0
        %1947 = vmatpush1.bf16.msra.mxu0 0
        %1948 = vmatprep.subr.bf16.mxu0 0
        %1949 = vmatpush1.bf16.msra.mxu0 0
        %1950 = vmatprep.subr.bf16.mxu0 0
        %1951 = vmatpush1.bf16.msra.mxu0 0
        %1952 = vmatprep.subr.bf16.mxu0 0
        %1953 = vmatpush1.bf16.msra.mxu0 0
        %1954 = vmatprep.subr.bf16.mxu0 0
        %1955 = vmatpush1.bf16.msra.mxu0 0
        %1956 = vmatprep.subr.bf16.mxu0 0
        %1957 = vmatpush1.bf16.msra.mxu0 0
        %1958 = vmatprep.subr.bf16.mxu0 0
        %1959 = vmatpush1.bf16.msra.mxu0 0
        %1960 = vmatprep.subr.bf16.mxu0 0
        %1961 = vmatpush1.bf16.msra.mxu0 0
        %1962 = vmatprep.subr.bf16.mxu0 0
        %1963 = vmatpush1.bf16.msra.mxu0 0
        %1964 = vmatprep.mubr.bf16.mxu0 0
        %1965 = vmatmul.mubr.bf16.gmra.mrb[0].mxu0 %v1930
        %v1966 = vpop.f32.mrb[0].mxu0
        %v1967 = vadd.f32 0.0, %v1966
        %v1968 = vpop.f32.mrb[0].mxu0
        %v1969 = vpop.f32.mrb[0].mxu0
        %v1970 = vadd.f32 0.0, %v1969
        %v1971 = vpop.f32.mrb[0].mxu0
        %1972 = vdwg.mxu0
        %v1977 = vunpack.c.l.b16 %v1867
        %v1978 = vunpack.c.l.b16 %v1868
        %v1979 = vunpack.c.l.b16 %v1869
        %v1980 = vunpack.c.l.b16 %v1870
        %v1981 = vpack.c.b16 %v1978, %v1977
        %v1982 = vpack.c.b16 %v1980, %v1979
        %v1986 = vsel %vm1137, %v1866, 0
        %1988 = vmatprep.subr.bf16.mxu0 0
        %1989 = vmatpush1.bf16.msra.mxu0 %v1981
        %1990 = vmatprep.subr.bf16.mxu0 0
        %1991 = vmatpush1.bf16.msra.mxu0 %v1982
        %1992 = vmatprep.subr.bf16.mxu0 0
        %1993 = vmatpush1.bf16.msra.mxu0 0
        %1994 = vmatprep.subr.bf16.mxu0 0
        %1995 = vmatpush1.bf16.msra.mxu0 0
        %1996 = vmatprep.subr.bf16.mxu0 0
        %1997 = vmatpush1.bf16.msra.mxu0 0
        %1998 = vmatprep.subr.bf16.mxu0 0
        %1999 = vmatpush1.bf16.msra.mxu0 0
        %2000 = vmatprep.subr.bf16.mxu0 0
        %2001 = vmatpush1.bf16.msra.mxu0 0
        %2002 = vmatprep.subr.bf16.mxu0 0
        %2003 = vmatpush1.bf16.msra.mxu0 0
        %2004 = vmatprep.subr.bf16.mxu0 0
        %2005 = vmatpush1.bf16.msra.mxu0 0
        %2006 = vmatprep.subr.bf16.mxu0 0
        %2007 = vmatpush1.bf16.msra.mxu0 0
        %2008 = vmatprep.subr.bf16.mxu0 0
        %2009 = vmatpush1.bf16.msra.mxu0 0
        %2010 = vmatprep.subr.bf16.mxu0 0
        %2011 = vmatpush1.bf16.msra.mxu0 0
        %2012 = vmatprep.subr.bf16.mxu0 0
        %2013 = vmatpush1.bf16.msra.mxu0 0
        %2014 = vmatprep.subr.bf16.mxu0 0
        %2015 = vmatpush1.bf16.msra.mxu0 0
        %2016 = vmatprep.subr.bf16.mxu0 0
        %2017 = vmatpush1.bf16.msra.mxu0 0
        %2018 = vmatprep.subr.bf16.mxu0 0
        %2019 = vmatpush1.bf16.msra.mxu0 0
        %2020 = vmatprep.mubr.bf16.mxu0 0
        %2021 = vmatmul.mubr.bf16.gmra.mrb[0].mxu0 %v1986
        %v2022 = vpop.f32.mrb[0].mxu0
        %v2023 = vadd.f32 %v1967, %v2022
        %v2024 = vpop.f32.mrb[0].mxu0
        %v2025 = vpop.f32.mrb[0].mxu0
        %v2026 = vadd.f32 %v1970, %v2025
        %v2027 = vpop.f32.mrb[0].mxu0
        %2028 = vdwg.mxu0
        %v2029 = vld [vmem:[%s15] sm:$0x1]
        %v2031 = vlaneseq
        %v2032 = vshrl.u32 %v2031, 7
        %v2033 = vsub.s32 0, %v2032
        %v2034 = vrot.slane %v2029, %v2033
        %v2036 = vadd.f32 %v2023, %v2034
        %v2037 = vadd.f32 %v2026, %v2034
        %v2038 = vtanh.pop %v2036
        %v2039 = vtanh.pop %v2037
        %2040 = vst.msk [vmem:[#allocation2] sm:$0xff] %vm1137, %v2038
        %2041 = vst.msk [vmem:[#allocation2 + $0x8] sm:$0xff] %vm1137, %v2039
        %v2042 = vld [vmem:[%s1140] sm:$0x1]
        %v2043 = vpack.c.bf16 %v2042, %v2042
        %v2044 = vld [vmem:[%s1143] sm:$0x1]
        %v2045 = vpack.c.bf16 %v2044, %v2044
        %v2046 = vld [vmem:[#allocation18] sm:$0xf]
        %v2047 = vld [vmem:[#allocation18 + $0x4] sm:$0xf]
        %v2048 = vld [vmem:[#allocation18 + $0x8] sm:$0xf]
        %v2049 = vld [vmem:[#allocation18 + $0xc] sm:$0xf]
        %v2054 = vunpack.c.l.b16 %v2046
        %v2055 = vunpack.c.l.b16 %v2047
        %v2056 = vunpack.c.l.b16 %v2048
        %v2057 = vunpack.c.l.b16 %v2049
        %v2058 = vpack.c.b16 %v2055, %v2054
        %v2059 = vpack.c.b16 %v2057, %v2056
        %v2063 = vsel %vm1137, %v2043, 0
        %2065 = vmatprep.subr.bf16.mxu0 0
        %2066 = vmatpush1.bf16.msra.mxu0 %v2058
        %2067 = vmatprep.subr.bf16.mxu0 0
        %2068 = vmatpush1.bf16.msra.mxu0 %v2059
        %2069 = vmatprep.subr.bf16.mxu0 0
        %2070 = vmatpush1.bf16.msra.mxu0 0
        %2071 = vmatprep.subr.bf16.mxu0 0
        %2072 = vmatpush1.bf16.msra.mxu0 0
        %2073 = vmatprep.subr.bf16.mxu0 0
        %2074 = vmatpush1.bf16.msra.mxu0 0
        %2075 = vmatprep.subr.bf16.mxu0 0
        %2076 = vmatpush1.bf16.msra.mxu0 0
        %2077 = vmatprep.subr.bf16.mxu0 0
        %2078 = vmatpush1.bf16.msra.mxu0 0
        %2079 = vmatprep.subr.bf16.mxu0 0
        %2080 = vmatpush1.bf16.msra.mxu0 0
        %2081 = vmatprep.subr.bf16.mxu0 0
        %2082 = vmatpush1.bf16.msra.mxu0 0
        %2083 = vmatprep.subr.bf16.mxu0 0
        %2084 = vmatpush1.bf16.msra.mxu0 0
        %2085 = vmatprep.subr.bf16.mxu0 0
        %2086 = vmatpush1.bf16.msra.mxu0 0
        %2087 = vmatprep.subr.bf16.mxu0 0
        %2088 = vmatpush1.bf16.msra.mxu0 0
        %2089 = vmatprep.subr.bf16.mxu0 0
        %2090 = vmatpush1.bf16.msra.mxu0 0
        %2091 = vmatprep.subr.bf16.mxu0 0
        %2092 = vmatpush1.bf16.msra.mxu0 0
        %2093 = vmatprep.subr.bf16.mxu0 0
        %2094 = vmatpush1.bf16.msra.mxu0 0
        %2095 = vmatprep.subr.bf16.mxu0 0
        %2096 = vmatpush1.bf16.msra.mxu0 0
        %2097 = vmatprep.mubr.bf16.mxu0 0
        %2098 = vmatmul.mubr.bf16.gmra.mrb[0].mxu0 %v2063
        %v2099 = vpop.f32.mrb[0].mxu0
        %v2100 = vadd.f32 0.0, %v2099
        %v2101 = vpop.f32.mrb[0].mxu0
        %v2102 = vpop.f32.mrb[0].mxu0
        %v2103 = vpop.f32.mrb[0].mxu0
        %2104 = vdwg.mxu0
        %v2105 = vadd.f32 %v1865, %v2100
        %v2106 = vld [vmem:[#allocation24] sm:$0xf]
        %v2107 = vld [vmem:[#allocation24 + $0x4] sm:$0xf]
        %v2108 = vld [vmem:[#allocation24 + $0x8] sm:$0xf]
        %v2109 = vld [vmem:[#allocation24 + $0xc] sm:$0xf]
        %v2114 = vunpack.c.l.b16 %v2106
        %v2115 = vunpack.c.l.b16 %v2107
        %v2116 = vunpack.c.l.b16 %v2108
        %v2117 = vunpack.c.l.b16 %v2109
        %v2118 = vpack.c.b16 %v2115, %v2114
        %v2119 = vpack.c.b16 %v2117, %v2116
        %v2123 = vsel %vm1137, %v2045, 0
        %2125 = vmatprep.subr.bf16.mxu0 0
        %2126 = vmatpush1.bf16.msra.mxu0 %v2118
        %2127 = vmatprep.subr.bf16.mxu0 0
        %2128 = vmatpush1.bf16.msra.mxu0 %v2119
        %2129 = vmatprep.subr.bf16.mxu0 0
        %2130 = vmatpush1.bf16.msra.mxu0 0
        %2131 = vmatprep.subr.bf16.mxu0 0
        %2132 = vmatpush1.bf16.msra.mxu0 0
        %2133 = vmatprep.subr.bf16.mxu0 0
        %2134 = vmatpush1.bf16.msra.mxu0 0
        %2135 = vmatprep.subr.bf16.mxu0 0
        %2136 = vmatpush1.bf16.msra.mxu0 0
        %2137 = vmatprep.subr.bf16.mxu0 0
        %2138 = vmatpush1.bf16.msra.mxu0 0
        %2139 = vmatprep.subr.bf16.mxu0 0
        %2140 = vmatpush1.bf16.msra.mxu0 0
        %2141 = vmatprep.subr.bf16.mxu0 0
        %2142 = vmatpush1.bf16.msra.mxu0 0
        %2143 = vmatprep.subr.bf16.mxu0 0
        %2144 = vmatpush1.bf16.msra.mxu0 0
        %2145 = vmatprep.subr.bf16.mxu0 0
        %2146 = vmatpush1.bf16.msra.mxu0 0
        %2147 = vmatprep.subr.bf16.mxu0 0
        %2148 = vmatpush1.bf16.msra.mxu0 0
        %2149 = vmatprep.subr.bf16.mxu0 0
        %2150 = vmatpush1.bf16.msra.mxu0 0
        %2151 = vmatprep.subr.bf16.mxu0 0
        %2152 = vmatpush1.bf16.msra.mxu0 0
        %2153 = vmatprep.subr.bf16.mxu0 0
        %2154 = vmatpush1.bf16.msra.mxu0 0
        %2155 = vmatprep.subr.bf16.mxu0 0
        %2156 = vmatpush1.bf16.msra.mxu0 0
        %2157 = vmatprep.mubr.bf16.mxu0 0
        %2158 = vmatmul.mubr.bf16.gmra.mrb[0].mxu0 %v2123
        %v2159 = vpop.f32.mrb[0].mxu0
        %v2160 = vadd.f32 0.0, %v2159
        %v2161 = vpop.f32.mrb[0].mxu0
        %v2162 = vpop.f32.mrb[0].mxu0
        %v2163 = vpop.f32.mrb[0].mxu0
        %2164 = vdwg.mxu0
        %v2165 = vadd.f32 %v2105, %v2160
        %v2166 = vmax.f32 %v2165, 0.0
        %v2167 = vpack.c.bf16 %v2166, %v2166
        %v2168 = vld [vmem:[%s25] sm:$0xf]
        %v2169 = vld [vmem:[%s25 + $0x4] sm:$0xf]
        %v2170 = vld [vmem:[%s25 + $0x8] sm:$0xf]
        %v2171 = vld [vmem:[%s25 + $0xc] sm:$0xf]
        %v2172 = vld [vmem:[%s25 + $0x10] sm:$0xf]
        %v2173 = vld [vmem:[%s25 + $0x14] sm:$0xf]
        %v2174 = vld [vmem:[%s25 + $0x18] sm:$0xf]
        %v2175 = vld [vmem:[%s25 + $0x1c] sm:$0xf]
        %v2176 = vld [vmem:[%s25 + $0x20] sm:$0xf]
        %v2177 = vld [vmem:[%s25 + $0x24] sm:$0xf]
        %v2178 = vld [vmem:[%s25 + $0x28] sm:$0xf]
        %v2179 = vld [vmem:[%s25 + $0x2c] sm:$0xf]
        %v2180 = vld [vmem:[%s25 + $0x30] sm:$0xf]
        %v2181 = vld [vmem:[%s25 + $0x34] sm:$0xf]
        %v2182 = vld [vmem:[%s25 + $0x38] sm:$0xf]
        %v2183 = vld [vmem:[%s25 + $0x3c] sm:$0xf]
        %v2184 = vld [vmem:[%s26] sm:$0x1]
        %v2201 = vunpack.c.l.b16 %v2168
        %v2202 = vunpack.c.l.b16 %v2169
        %v2203 = vunpack.c.l.b16 %v2170
        %v2204 = vunpack.c.l.b16 %v2171
        %v2205 = vunpack.c.l.b16 %v2172
        %v2206 = vunpack.c.l.b16 %v2173
        %v2207 = vunpack.c.l.b16 %v2174
        %v2208 = vunpack.c.l.b16 %v2175
        %v2209 = vunpack.c.l.b16 %v2176
        %v2210 = vunpack.c.l.b16 %v2177
        %v2211 = vunpack.c.l.b16 %v2178
        %v2212 = vunpack.c.l.b16 %v2179
        %v2213 = vunpack.c.l.b16 %v2180
        %v2214 = vunpack.c.l.b16 %v2181
        %v2215 = vunpack.c.l.b16 %v2182
        %v2216 = vunpack.c.l.b16 %v2183
        %v2217 = vpack.c.b16 %v2202, %v2201
        %v2218 = vpack.c.b16 %v2204, %v2203
        %v2219 = vpack.c.b16 %v2206, %v2205
        %v2220 = vpack.c.b16 %v2208, %v2207
        %v2221 = vpack.c.b16 %v2210, %v2209
        %v2222 = vpack.c.b16 %v2212, %v2211
        %v2223 = vpack.c.b16 %v2214, %v2213
        %v2224 = vpack.c.b16 %v2216, %v2215
        %2233 = vmatprep.subr.bf16.mxu0 0
        %2234 = vmatpush1.bf16.msra.mxu0 %v2217
        %2235 = vmatprep.subr.bf16.mxu0 0
        %2236 = vmatpush1.bf16.msra.mxu0 %v2218
        %2237 = vmatprep.subr.bf16.mxu0 0
        %2238 = vmatpush1.bf16.msra.mxu0 %v2219
        %2239 = vmatprep.subr.bf16.mxu0 0
        %2240 = vmatpush1.bf16.msra.mxu0 %v2220
        %2241 = vmatprep.subr.bf16.mxu0 0
        %2242 = vmatpush1.bf16.msra.mxu0 %v2221
        %2243 = vmatprep.subr.bf16.mxu0 0
        %2244 = vmatpush1.bf16.msra.mxu0 %v2222
        %2245 = vmatprep.subr.bf16.mxu0 0
        %2246 = vmatpush1.bf16.msra.mxu0 %v2223
        %2247 = vmatprep.subr.bf16.mxu0 0
        %2248 = vmatpush1.bf16.msra.mxu0 %v2224
        %2249 = vmatprep.subr.bf16.mxu0 0
        %2250 = vmatpush1.bf16.msra.mxu0 0
        %2251 = vmatprep.subr.bf16.mxu0 0
        %2252 = vmatpush1.bf16.msra.mxu0 0
        %2253 = vmatprep.subr.bf16.mxu0 0
        %2254 = vmatpush1.bf16.msra.mxu0 0
        %2255 = vmatprep.subr.bf16.mxu0 0
        %2256 = vmatpush1.bf16.msra.mxu0 0
        %2257 = vmatprep.subr.bf16.mxu0 0
        %2258 = vmatpush1.bf16.msra.mxu0 0
        %2259 = vmatprep.subr.bf16.mxu0 0
        %2260 = vmatpush1.bf16.msra.mxu0 0
        %2261 = vmatprep.subr.bf16.mxu0 0
        %2262 = vmatpush1.bf16.msra.mxu0 0
        %2263 = vmatprep.subr.bf16.mxu0 0
        %2264 = vmatpush1.bf16.msra.mxu0 0
        %2265 = vmatprep.mubr.bf16.mxu0 0
        %2266 = vmatmul.mubr.bf16.gmra.mrb[0].mxu0 %v2167
        %v2267 = vpop.f32.mrb[0].mxu0
        %v2268 = vadd.f32 %v2184, %v2267
        %v2269 = vpop.f32.mrb[0].mxu0
        %v2270 = vpop.f32.mrb[0].mxu0
        %v2271 = vpop.f32.mrb[0].mxu0
        %2272 = vdwg.mxu0
        %v2273 = vlaneseq
        %v2274 = vshrl.u32 %v2273, 7
        %v2275 = vsub.s32 0, %v2274
        %v2276 = vrot.slane %v2268, %v2275
        %2277 = vst [vmem:[%s957] sm:$0xff] %v2276
        %s2278 = sand.u32 %s599, 1
        %s2279 = scalar_lea.sflag [#allocation8], %s2278
        %s2280 = sand.u32 %s599, 1
        %s2281 = smul.addr %s2280, 8
        %s2282 = scalar_lea.vmem [#allocation26], %s2281
        // Predicated region
        $region169: #{tpu_custom_call.1} parent=119 // pred_check
          %p2283 = pneg %p609
        $region170: #{tpu_custom_call.1} parent=119 // pred_check_branch
          %2285 = sbr.rel (%p2283) target = $region172
        $region171: #{tpu_custom_call.1} parent=119 // pred_region
          %s2287 = ssub.s32 128, 128
          %2288 = vsyncadd %s2279, %s2287
          %s2289 = smul.addr %s56, 128
          %s2290 = scalar_lea.hbm %s27, %s2289
          %s2292 = sshll.u32 %s2282, 4
          %s2293 = int_to_ptr.vmem [resolvable:$true] %s2292
          %2295 = dma.vmem_to_hbm [thread:$0]  %s2293, 128, %s2290, %s2279
        $region172: #{tpu_custom_call.1} parent=119 // pred_fallthru
          _
      $region120: #{tpu_custom_call.1} parent=5 // pred_fallthru
        _
      %p2296 = scmp.le.s32.totalorder 2, %s51
      // Predicated region
      $region173: #{tpu_custom_call.1} parent=5 // pred_check
        %p2297 = pneg %p2296
      $region174: #{tpu_custom_call.1} parent=5 // pred_check_branch
        %2299 = sbr.rel (%p2297) target = $region176
      $region175: #{tpu_custom_call.1} parent=5 // pred_region
        %s2300 = ssub.s32 %s51, 2
        // Predicated region
        $region177: #{tpu_custom_call.1} parent=175 // pred_check
          %p2301 = pneg %p615
        $region178: #{tpu_custom_call.1} parent=175 // pred_check_branch
          %2303 = sbr.rel (%p2301) target = $region180
        $region179: #{tpu_custom_call.1} parent=175 // pred_region
          %s2304 = sand.u32 %s600, 1
          %s2305 = scalar_lea.sflag [#allocation8], %s2304
          %s2306 = sand.u32 %s600, 1
          %s2307 = smul.addr %s2306, 8
          %s2308 = scalar_lea.vmem [#allocation26], %s2307
          %2309 = dma.done %s2305, 128
        $region180: #{tpu_custom_call.1} parent=175 // pred_fallthru
          _
      $region176: #{tpu_custom_call.1} parent=5 // pred_fallthru
        _
    $region6: #{tpu_custom_call.1} parent=1 // loop_footer
      %s55 = sadd.s32 1, %s51
    $region7: #{tpu_custom_call.1} parent=1 // loop_footer_branch
      %50 = sbr.rel target = $region3
    $region8: #{tpu_custom_call.1} parent=1 // loop_exit
      _
    %2310 = vsyncpa [#allocation7], 1
    %s2311 = scalar_lea.sflag [#allocation7], 1
    %2312 = vsyncpa %s2311, 1
    %2313 = vsyncpa [#allocation10], 1
    %2314 = vsyncpa [#allocation13], 1
    %2315 = vsyncpa [#allocation16], 1
    %2316 = vsyncpa [#allocation19], 1
    %2317 = vsyncpa [#allocation22], 1
    %2318 = vsyncpa [#allocation25], 1
    %2319 = vsyncpa [#allocation8], 1
    %s2320 = scalar_lea.sflag [#allocation8], 1
    %2321 = vsyncpa %s2320, 1

</llo_original>
